<compile_context>
chip_gen: v7x
topology: tpu7x:2x2x1
jax: 0.10.0
libtpu: 0.0.40
codegen_flags: <defaults>
</compile_context>

<pallas_src>
import jax
import jax.numpy as jnp
from jax import lax
from jax.experimental import pallas as pl
from jax.experimental.pallas import tpu as pltpu

BN_EPS = 1e-5


def _vmem():
    return pl.BlockSpec(memory_space=pltpu.MemorySpace.VMEM)


# ----------------------------------------------------------------------------
# Fused DecoderBlock kernel.
#   Activation layout: rows = (n, y), lanes = x*C + c (channels-last folded
#   into the lane axis).  Up-sampled channels occupy c in [0, Cf), skip
#   channels c in [Cf, Cin)  (== torch.cat([up, skip], dim=1) order).
# ----------------------------------------------------------------------------
def _make_kernel(N, H, W, Cf):
    NH = N * H
    WCf = W * Cf
    inv_count = 1.0 / float(N * H * W)

    def kernel(xrow_ref, skip_ref, bigwt_ref, biasup_ref,
               bw1_ref, aff1_ref, bw2_ref, aff2_ref, o_ref):
        # Row-boundary masks shared by both 3x3 convs (rows = (n, y)).
        row = lax.broadcasted_iota(jnp.int32, (NH, 1), 0)
        is_top = (row % H) == 0          # y == 0   -> no y-1 contribution
        is_bot = (row % H) == (H - 1)    # y == H-1 -> no y+1 contribution

        def conv3x3(act, bw_ref):
            # act: (NH, W*Ci) f32.  ky row shifts via XLU sublane rolls with a
            # boundary mask; the 3 ky taps become ONE fat-K bf16 MXU matmul
            # (kx taps + width zero padding are folded into the host-built
            # Toeplitz weight), accumulated in f32.
            up_sh = jnp.where(is_top, 0.0, pltpu.roll(act, 1, 0))       # row y holds y-1
            dn_sh = jnp.where(is_bot, 0.0, pltpu.roll(act, NH - 1, 0))  # row y holds y+1
            lhs = jnp.concatenate([up_sh.astype(jnp.bfloat16),
                                   act.astype(jnp.bfloat16),
                                   dn_sh.astype(jnp.bfloat16)], axis=1)
            return jnp.dot(lhs, bw_ref[...], preferred_element_type=jnp.float32)

        def bias_bn_relu(z, aff_ref):
            # aff rows: [conv bias, BN gamma, BN beta], each lane-tiled across W.
            z = z + aff_ref[0:1, :]
            # Per-channel batch stats (training-mode BN), all in f32:
            # one cross-sublane sum, then a log2(W) lane roll-and-add tree that
            # also broadcasts the per-channel totals back to every W group.
            s = jnp.concatenate([jnp.sum(z, axis=0, keepdims=True),
                                 jnp.sum(z * z, axis=0, keepdims=True)], axis=0)
            shift = Cf
            while shift < WCf:
                s = s + pltpu.roll(s, shift, 1)
                shift *= 2
            mean = s[0:1, :] * inv_count
            var = s[1:2, :] * inv_count - mean * mean
            y = (z - mean) * lax.rsqrt(var + BN_EPS) * aff_ref[1:2, :] + aff_ref[2:3, :]
            return jnp.maximum(y, 0.0)

        # ConvTranspose2d(k=2, s=2): ONE MXU matmul.  Output-row parity is part
        # of the (host-built, zero-interleaved) K axis, so the result rows come
        # out already in (n, y) order -- no in-kernel relayout.
        up = jnp.dot(xrow_ref[...], bigwt_ref[...],
                     preferred_element_type=jnp.float32)
        # torch.cat([up, skip], dim=1): skip values are pre-placed in their
        # lane slots (up slots zero) -> plain add, no selector matmul.
        a1 = up + biasup_ref[...] + skip_ref[...].astype(jnp.float32)

        y1 = bias_bn_relu(conv3x3(a1, bw1_ref), aff1_ref)            # conv1+BN1+ReLU
        o_ref[...] = bias_bn_relu(conv3x3(y1, bw2_ref), aff2_ref)    # conv2+BN2+ReLU

    return kernel


# ----------------------------------------------------------------------------
# One-time host-side constant preparation (hoisted out of the hot path).
# All scatter/concat/window structure is baked into small bf16 weight matrices
# so the kernel only does dense matmuls, rolls and elementwise math.
# ----------------------------------------------------------------------------
def prepare_decoder_constants(p, out_w):
    f32, bf16 = jnp.float32, jnp.bfloat16
    Cin, Cf = p["wt"].shape[0], p["wt"].shape[1]
    Cskip = Cin - Cf
    W = out_w
    W0 = W // 2
    wt = p["wt"].astype(f32)                                         # (Cin, Cf, 2, 2)

    # ConvTranspose weight as (2*Cin*W0) x (W*Cin):
    #   K index = di*Cin*W0 + c*W0 + j  (di = output-row parity)
    #   column  = x*Cin + f             (skip slots f >= Cf are zero)
    xs = jnp.arange(W)
    selw = (jnp.arange(W0)[:, None] == xs[None, :] // 2).astype(f32)  # (W0, W)
    par = (jnp.arange(2)[:, None] == xs[None, :] % 2).astype(f32)     # (2, W)
    core = jnp.einsum("cfde,jx,ex->dcjxf", wt, selw, par)             # (2,Cin,W0,W,Cf)
    core = jnp.pad(core, ((0, 0), (0, 0), (0, 0), (0, 0), (0, Cin - Cf)))
    bigwt = core.reshape(2 * Cin * W0, W * Cin).astype(bf16)

    biasup = jnp.tile(jnp.concatenate([p["bt"].astype(f32),
                                       jnp.zeros((Cskip,), f32)]), (W,))
    biasup = biasup.reshape(1, W * Cin)

    # 3x3 conv as one fat-K width-Toeplitz matrix (ky blocks stacked along K to
    # match the in-kernel [roll(+1), identity, roll(-1)] LHS lane concat):
    #   bw[ky*W*Ci + xin*Ci + c, x*Co + f] = w[ky, xin-x+1, c, f]  (0 off-tap)
    def toeplitz(w_hwio, ci, co):
        mask = (jnp.arange(W)[None, :, None] ==
                jnp.arange(W)[None, None, :] + jnp.arange(3)[:, None, None] - 1)
        big = jnp.einsum("kab,ykcf->yacbf", mask.astype(f32), w_hwio.astype(f32))
        return big.reshape(3 * W * ci, W * co).astype(bf16)

    def aff(b, g, be):
        return jnp.stack([jnp.tile(b.astype(f32), (W,)),
                          jnp.tile(g.astype(f32), (W,)),
                          jnp.tile(be.astype(f32), (W,))])

    return {"bigwt": bigwt, "biasup": biasup,
            "bw1": toeplitz(p["w1"], Cin, Cf),
            "aff1": aff(p["b1"], p["g1"], p["be1"]),
            "bw2": toeplitz(p["w2"], Cf, Cf),
            "aff2": aff(p["b2"], p["g2"], p["be2"])}


# ----------------------------------------------------------------------------
# Wrapper: DecoderBlock.forward(x, skip_features)   (NCHW in / NCHW out)
# ----------------------------------------------------------------------------
def _decoder_block_impl(x_nchw, skip_nchw, consts):
    N, Cin, H0, W0 = x_nchw.shape
    _, Cskip, H, W = skip_nchw.shape
    Cf = Cin - Cskip
    assert (H, W) == (2 * H0, 2 * W0)
    assert (W & (W - 1)) == 0, "roll-tree BN reduction assumes power-of-two W"
    # TODO(synk): non-power-of-two W would need a selector-matmul reduce fallback.

    f32, bf16 = jnp.float32, jnp.bfloat16

    # ---- tiny per-call layout glue (rows = (n, y), width*channels on lanes) --
    # Low-res rows duplicated with output-row parity folded into the K axis:
    # row (n, 2*i + di) holds low-res row (n, i) in K-half di, zeros elsewhere.
    xr = jnp.transpose(x_nchw.astype(f32), (0, 2, 1, 3)).reshape(N, H0, Cin * W0)
    zz = jnp.zeros_like(xr)
    xrow = jnp.stack([jnp.concatenate([xr, zz], axis=-1),
                      jnp.concatenate([zz, xr], axis=-1)], axis=2)
    xrow = xrow.reshape(N * H, 2 * Cin * W0).astype(bf16)
    # Skip channels pre-placed at lanes x*Cin + (Cf .. Cin-1); up slots zero.
    sk = jnp.transpose(skip_nchw.astype(f32), (0, 2, 3, 1))           # (N,H,W,Cskip)
    sk = jnp.pad(sk, ((0, 0), (0, 0), (0, 0), (Cf, 0)))               # (N,H,W,Cin)
    skiprow = sk.reshape(N * H, W * Cin).astype(bf16)

    kernel = _make_kernel(N, H, W, Cf)
    out_rows = pl.pallas_call(
        kernel,
        out_shape=jax.ShapeDtypeStruct((N * H, W * Cf), f32),
        in_specs=[_vmem()] * 8,
        out_specs=_vmem(),
    )(xrow, skiprow, consts["bigwt"], consts["biasup"],
      consts["bw1"], consts["aff1"], consts["bw2"], consts["aff2"])

    # (N*H, W*Cf) rows are NHWC -> back to NCHW.
    return jnp.transpose(out_rows.reshape(N, H, W, Cf), (0, 3, 1, 2))


decoder_block = jax.jit(_decoder_block_impl)


# ----------------------------------------------------------------------------
# Pure-JAX reference (f32 lax convs) for correctness checking.
# ----------------------------------------------------------------------------
def reference(x_nchw, skip_nchw, p):
    x = jnp.transpose(x_nchw, (0, 2, 3, 1)).astype(jnp.float32)
    skip = jnp.transpose(skip_nchw, (0, 2, 3, 1)).astype(jnp.float32)

    # ConvTranspose2d(k=2,s=2,pad=0) == dilated conv with flipped kernel, pad k-1
    w_flip = p["wt"][:, :, ::-1, ::-1]                     # (Cin, Cf, 2, 2)
    w_hwio = jnp.transpose(w_flip, (2, 3, 0, 1))           # (2, 2, Cin, Cf)
    up = lax.conv_general_dilated(
        x, w_hwio, window_strides=(1, 1), padding=[(1, 1), (1, 1)],
        lhs_dilation=(2, 2), dimension_numbers=("NHWC", "HWIO", "NHWC"),
        precision=lax.Precision.HIGHEST) + p["bt"]
    xcat = jnp.concatenate([up, skip], axis=-1)

    def conv_bn_relu(z, w, b, g, be):
        c = lax.conv_general_dilated(
            z, w, (1, 1), [(1, 1), (1, 1)],
            dimension_numbers=("NHWC", "HWIO", "NHWC"),
            precision=lax.Precision.HIGHEST) + b
        m = jnp.mean(c, axis=(0, 1, 2), keepdims=True)
        v = jnp.mean((c - m) ** 2, axis=(0, 1, 2), keepdims=True)
        return jnp.maximum((c - m) * lax.rsqrt(v + BN_EPS) * g + be, 0.0)

    y = conv_bn_relu(xcat, p["w1"], p["b1"], p["g1"], p["be1"])
    y = conv_bn_relu(y, p["w2"], p["b2"], p["g2"], p["be2"])
    return jnp.transpose(y, (0, 3, 1, 2))


if __name__ == "__main__":
    # DecoderBlock(in_channels=8, num_filters=4):
    #   x:    (2, 8, 16, 16) -> conv_transpose -> (2, 4, 32, 32)
    #   skip: (2, 4, 32, 32) -> cat -> (2, 8, 32, 32) -> ConvBlock -> (2, 4, 32, 32)
    N, IN_CH, NF, H0, W0 = 2, 8, 4, 16, 16
    SKIP_CH = IN_CH - NF

    key = jax.random.PRNGKey(0)
    ks = jax.random.split(key, 12)
    params = {
        "wt":  0.1 * jax.random.normal(ks[0], (IN_CH, NF, 2, 2), jnp.float32),
        "bt":  0.1 * jax.random.normal(ks[1], (NF,), jnp.float32),
        "w1":  0.1 * jax.random.normal(ks[2], (3, 3, IN_CH, NF), jnp.float32),  # HWIO
        "b1":  0.1 * jax.random.normal(ks[3], (NF,), jnp.float32),
        "g1":  1.0 + 0.1 * jax.random.normal(ks[4], (NF,), jnp.float32),
        "be1": 0.1 * jax.random.normal(ks[5], (NF,), jnp.float32),
        "w2":  0.1 * jax.random.normal(ks[6], (3, 3, NF, NF), jnp.float32),     # HWIO
        "b2":  0.1 * jax.random.normal(ks[7], (NF,), jnp.float32),
        "g2":  1.0 + 0.1 * jax.random.normal(ks[8], (NF,), jnp.float32),
        "be2": 0.1 * jax.random.normal(ks[9], (NF,), jnp.float32),
    }
    x = jax.random.normal(ks[10], (N, IN_CH, H0, W0), jnp.float32)
    skip = jax.random.normal(ks[11], (N, SKIP_CH, 2 * H0, 2 * W0), jnp.float32)

    # Constant prep once, outside the per-call hot path (perf-review item).
    consts = prepare_decoder_constants(params, 2 * W0)

    out = jax.block_until_ready(decoder_block(x, skip, consts))
    ref = reference(x, skip, params)

    assert out.shape == (N, NF, 2 * H0, 2 * W0), out.shape
    # bf16 MXU operands (f32 accumulation + f32 BN statistics) -> compare at a
    # bf16-appropriate tolerance against the f32 reference.
    err = float(jnp.max(jnp.abs(out - ref)))
    assert jnp.allclose(out, ref, atol=3e-2, rtol=3e-2), err
    print("KERNEL_OK")
</pallas_src>

<mosaic_0001>
module attributes {stable_mosaic.version = 11 : i64} {
  func.func @kernel(%arg0: memref<64x256xbf16, #tpu.memory_space<vmem>>, %arg1: memref<64x256xbf16, #tpu.memory_space<vmem>>, %arg2: memref<256x256xbf16, #tpu.memory_space<vmem>>, %arg3: memref<1x256xf32, #tpu.memory_space<vmem>>, %arg4: memref<768x128xbf16, #tpu.memory_space<vmem>>, %arg5: memref<3x128xf32, #tpu.memory_space<vmem>>, %arg6: memref<384x128xbf16, #tpu.memory_space<vmem>>, %arg7: memref<3x128xf32, #tpu.memory_space<vmem>>, %arg8: memref<64x128xf32, #tpu.memory_space<vmem>>) attributes {dimension_semantics = [], scalar_prefetch = 0 : i64, scratch_operands = 0 : i64, tpu.core_type = #tpu.core_type<tc>} {
    %0 = tpu.iota {dimensions = array<i32: 0>} : vector<64x1xi32>
    %c32_i32 = arith.constant 32 : i32
    %c0_i32 = arith.constant 0 : i32
    %1 = arith.cmpi eq, %c32_i32, %c0_i32 : i32
    %c1_i32 = arith.constant 1 : i32
    %2 = arith.select %1, %c1_i32, %c32_i32 : i32
    %3 = vector.broadcast %2 : i32 to vector<64x1xi32>
    %4 = arith.remsi %0, %3 : vector<64x1xi32>
    %c0_i32_0 = arith.constant 0 : i32
    %5 = vector.broadcast %c0_i32_0 : i32 to vector<64x1xi32>
    %6 = arith.cmpi ne, %4, %5 : vector<64x1xi32>
    %c0_i32_1 = arith.constant 0 : i32
    %7 = vector.broadcast %c0_i32_1 : i32 to vector<64x1xi32>
    %8 = arith.cmpi slt, %4, %7 : vector<64x1xi32>
    %c0_i32_2 = arith.constant 0 : i32
    %9 = arith.cmpi slt, %2, %c0_i32_2 : i32
    %10 = vector.broadcast %9 : i1 to vector<64x1xi1>
    %11 = vector.broadcast %10 : vector<64x1xi1> to vector<64x1xi1>
    %12 = arith.xori %8, %11 : vector<64x1xi1>
    %13 = arith.andi %12, %6 : vector<64x1xi1>
    %14 = vector.broadcast %2 : i32 to vector<64x1xi32>
    %15 = arith.addi %4, %14 : vector<64x1xi32>
    %16 = arith.select %13, %15, %4 : vector<64x1xi1>, vector<64x1xi32>
    %c0_i32_3 = arith.constant 0 : i32
    %17 = vector.broadcast %c0_i32_3 : i32 to vector<64x1xi32>
    %18 = arith.cmpi eq, %16, %17 : vector<64x1xi32>
    %c32_i32_4 = arith.constant 32 : i32
    %c0_i32_5 = arith.constant 0 : i32
    %19 = arith.cmpi eq, %c32_i32_4, %c0_i32_5 : i32
    %c1_i32_6 = arith.constant 1 : i32
    %20 = arith.select %19, %c1_i32_6, %c32_i32_4 : i32
    %21 = vector.broadcast %20 : i32 to vector<64x1xi32>
    %22 = arith.remsi %0, %21 : vector<64x1xi32>
    %c0_i32_7 = arith.constant 0 : i32
    %23 = vector.broadcast %c0_i32_7 : i32 to vector<64x1xi32>
    %24 = arith.cmpi ne, %22, %23 : vector<64x1xi32>
    %c0_i32_8 = arith.constant 0 : i32
    %25 = vector.broadcast %c0_i32_8 : i32 to vector<64x1xi32>
    %26 = arith.cmpi slt, %22, %25 : vector<64x1xi32>
    %c0_i32_9 = arith.constant 0 : i32
    %27 = arith.cmpi slt, %20, %c0_i32_9 : i32
    %28 = vector.broadcast %27 : i1 to vector<64x1xi1>
    %29 = vector.broadcast %28 : vector<64x1xi1> to vector<64x1xi1>
    %30 = arith.xori %26, %29 : vector<64x1xi1>
    %31 = arith.andi %30, %24 : vector<64x1xi1>
    %32 = vector.broadcast %20 : i32 to vector<64x1xi32>
    %33 = arith.addi %22, %32 : vector<64x1xi32>
    %34 = arith.select %31, %33, %22 : vector<64x1xi1>, vector<64x1xi32>
    %c31_i32 = arith.constant 31 : i32
    %35 = vector.broadcast %c31_i32 : i32 to vector<64x1xi32>
    %36 = arith.cmpi eq, %34, %35 : vector<64x1xi32>
    %c0 = arith.constant 0 : index
    %c0_10 = arith.constant 0 : index
    %37 = vector.load %arg0[%c0, %c0_10] : memref<64x256xbf16, #tpu.memory_space<vmem>>, vector<64x256xbf16>
    %c0_11 = arith.constant 0 : index
    %c0_12 = arith.constant 0 : index
    %38 = vector.load %arg2[%c0_11, %c0_12] : memref<256x256xbf16, #tpu.memory_space<vmem>>, vector<256x256xbf16>
    %cst = arith.constant dense<0.000000e+00> : vector<64x256xf32>
    %39 = tpu.matmul %37, %38, %cst {dimension_numbers = #tpu.dot_dimension_numbers<[1], [0], [0], [1], [0, 0, 1, 1], [], []>} : vector<64x256xbf16>, vector<256x256xbf16>, vector<64x256xf32> -> vector<64x256xf32>
    %c0_13 = arith.constant 0 : index
    %c0_14 = arith.constant 0 : index
    %40 = vector.load %arg3[%c0_13, %c0_14] : memref<1x256xf32, #tpu.memory_space<vmem>>, vector<1x256xf32>
    %41 = vector.broadcast %40 : vector<1x256xf32> to vector<64x256xf32>
    %42 = arith.addf %39, %41 : vector<64x256xf32>
    %c0_15 = arith.constant 0 : index
    %c0_16 = arith.constant 0 : index
    %43 = vector.load %arg1[%c0_15, %c0_16] : memref<64x256xbf16, #tpu.memory_space<vmem>>, vector<64x256xbf16>
    %44 = arith.extf %43 : vector<64x256xbf16> to vector<64x256xf32>
    %45 = arith.addf %42, %44 : vector<64x256xf32>
    %c1_i32_17 = arith.constant 1 : i32
    %46 = tpu.dynamic_rotate %45 by %c1_i32_17 dim 0 : vector<64x256xf32>, i32 -> vector<64x256xf32>
    %cst_18 = arith.constant 0.000000e+00 : f32
    %47 = vector.shape_cast %18 : vector<64x1xi1> to vector<64x1xi1>
    %48 = vector.broadcast %47 : vector<64x1xi1> to vector<64x256xi1>
    %49 = vector.broadcast %cst_18 : f32 to vector<64x256xf32>
    %50 = arith.select %48, %49, %46 : vector<64x256xi1>, vector<64x256xf32>
    %c63_i32 = arith.constant 63 : i32
    %51 = tpu.dynamic_rotate %45 by %c63_i32 dim 0 : vector<64x256xf32>, i32 -> vector<64x256xf32>
    %cst_19 = arith.constant 0.000000e+00 : f32
    %52 = vector.shape_cast %36 : vector<64x1xi1> to vector<64x1xi1>
    %53 = vector.broadcast %52 : vector<64x1xi1> to vector<64x256xi1>
    %54 = vector.broadcast %cst_19 : f32 to vector<64x256xf32>
    %55 = arith.select %53, %54, %51 : vector<64x256xi1>, vector<64x256xf32>
    %56 = arith.truncf %50 : vector<64x256xf32> to vector<64x256xbf16>
    %57 = arith.truncf %45 : vector<64x256xf32> to vector<64x256xbf16>
    %58 = arith.truncf %55 : vector<64x256xf32> to vector<64x256xbf16>
    %59 = tpu.concatenate %56, %57, %58 in 1 : vector<64x256xbf16>, vector<64x256xbf16>, vector<64x256xbf16> -> vector<64x768xbf16>
    %c0_20 = arith.constant 0 : index
    %c0_21 = arith.constant 0 : index
    %60 = vector.load %arg4[%c0_20, %c0_21] : memref<768x128xbf16, #tpu.memory_space<vmem>>, vector<768x128xbf16>
    %cst_22 = arith.constant dense<0.000000e+00> : vector<64x128xf32>
    %61 = tpu.matmul %59, %60, %cst_22 {dimension_numbers = #tpu.dot_dimension_numbers<[1], [0], [0], [1], [0, 0, 1, 1], [], []>} : vector<64x768xbf16>, vector<768x128xbf16>, vector<64x128xf32> -> vector<64x128xf32>
    %c0_23 = arith.constant 0 : index
    %c0_24 = arith.constant 0 : index
    %62 = vector.load %arg5[%c0_23, %c0_24] : memref<3x128xf32, #tpu.memory_space<vmem>>, vector<1x128xf32>
    %63 = vector.broadcast %62 : vector<1x128xf32> to vector<64x128xf32>
    %64 = arith.addf %61, %63 : vector<64x128xf32>
    %cst_25 = arith.constant dense<0.000000e+00> : vector<128xf32>
    %65 = vector.multi_reduction <add>, %64, %cst_25 [0] : vector<64x128xf32> to vector<128xf32>
    %66 = vector.shape_cast %65 : vector<128xf32> to vector<1x128xf32>
    %67 = arith.mulf %64, %64 : vector<64x128xf32>
    %cst_26 = arith.constant dense<0.000000e+00> : vector<128xf32>
    %68 = vector.multi_reduction <add>, %67, %cst_26 [0] : vector<64x128xf32> to vector<128xf32>
    %69 = vector.shape_cast %68 : vector<128xf32> to vector<1x128xf32>
    %70 = tpu.concatenate %66, %69 in 0 : vector<1x128xf32>, vector<1x128xf32> -> vector<2x128xf32>
    %c4_i32 = arith.constant 4 : i32
    %71 = tpu.dynamic_rotate %70 by %c4_i32 dim 1 : vector<2x128xf32>, i32 -> vector<2x128xf32>
    %72 = arith.addf %70, %71 : vector<2x128xf32>
    %c8_i32 = arith.constant 8 : i32
    %73 = tpu.dynamic_rotate %72 by %c8_i32 dim 1 : vector<2x128xf32>, i32 -> vector<2x128xf32>
    %74 = arith.addf %72, %73 : vector<2x128xf32>
    %c16_i32 = arith.constant 16 : i32
    %75 = tpu.dynamic_rotate %74 by %c16_i32 dim 1 : vector<2x128xf32>, i32 -> vector<2x128xf32>
    %76 = arith.addf %74, %75 : vector<2x128xf32>
    %c32_i32_27 = arith.constant 32 : i32
    %77 = tpu.dynamic_rotate %76 by %c32_i32_27 dim 1 : vector<2x128xf32>, i32 -> vector<2x128xf32>
    %78 = arith.addf %76, %77 : vector<2x128xf32>
    %c64_i32 = arith.constant 64 : i32
    %79 = tpu.dynamic_rotate %78 by %c64_i32 dim 1 : vector<2x128xf32>, i32 -> vector<2x128xf32>
    %80 = arith.addf %78, %79 : vector<2x128xf32>
    %81 = vector.extract_strided_slice %80 {offsets = [0, 0], sizes = [1, 128], strides = [1, 1]} : vector<2x128xf32> to vector<1x128xf32>
    %cst_28 = arith.constant 4.8828125E-4 : f32
    %82 = vector.broadcast %cst_28 : f32 to vector<1x128xf32>
    %83 = arith.mulf %81, %82 : vector<1x128xf32>
    %84 = vector.extract_strided_slice %80 {offsets = [1, 0], sizes = [1, 128], strides = [1, 1]} : vector<2x128xf32> to vector<1x128xf32>
    %cst_29 = arith.constant 4.8828125E-4 : f32
    %85 = vector.broadcast %cst_29 : f32 to vector<1x128xf32>
    %86 = arith.mulf %84, %85 : vector<1x128xf32>
    %87 = arith.mulf %83, %83 : vector<1x128xf32>
    %88 = arith.subf %86, %87 : vector<1x128xf32>
    %89 = vector.broadcast %83 : vector<1x128xf32> to vector<64x128xf32>
    %90 = arith.subf %64, %89 : vector<64x128xf32>
    %cst_30 = arith.constant 9.99999974E-6 : f32
    %91 = vector.broadcast %cst_30 : f32 to vector<1x128xf32>
    %92 = arith.addf %88, %91 : vector<1x128xf32>
    %93 = math.rsqrt %92 : vector<1x128xf32>
    %94 = vector.broadcast %93 : vector<1x128xf32> to vector<64x128xf32>
    %95 = arith.mulf %90, %94 : vector<64x128xf32>
    %c1 = arith.constant 1 : index
    %c0_31 = arith.constant 0 : index
    %96 = vector.load %arg5[%c1, %c0_31] : memref<3x128xf32, #tpu.memory_space<vmem>>, vector<1x128xf32>
    %97 = vector.broadcast %96 : vector<1x128xf32> to vector<64x128xf32>
    %98 = arith.mulf %95, %97 : vector<64x128xf32>
    %c2 = arith.constant 2 : index
    %c0_32 = arith.constant 0 : index
    %99 = vector.load %arg5[%c2, %c0_32] : memref<3x128xf32, #tpu.memory_space<vmem>>, vector<1x128xf32>
    %100 = vector.broadcast %99 : vector<1x128xf32> to vector<64x128xf32>
    %101 = arith.addf %98, %100 : vector<64x128xf32>
    %cst_33 = arith.constant 0.000000e+00 : f32
    %102 = vector.broadcast %cst_33 : f32 to vector<64x128xf32>
    %103 = arith.maximumf %101, %102 : vector<64x128xf32>
    %c1_i32_34 = arith.constant 1 : i32
    %104 = tpu.dynamic_rotate %103 by %c1_i32_34 dim 0 : vector<64x128xf32>, i32 -> vector<64x128xf32>
    %cst_35 = arith.constant 0.000000e+00 : f32
    %105 = vector.shape_cast %18 : vector<64x1xi1> to vector<64x1xi1>
    %106 = vector.broadcast %105 : vector<64x1xi1> to vector<64x128xi1>
    %107 = vector.broadcast %cst_35 : f32 to vector<64x128xf32>
    %108 = arith.select %106, %107, %104 : vector<64x128xi1>, vector<64x128xf32>
    %c63_i32_36 = arith.constant 63 : i32
    %109 = tpu.dynamic_rotate %103 by %c63_i32_36 dim 0 : vector<64x128xf32>, i32 -> vector<64x128xf32>
    %cst_37 = arith.constant 0.000000e+00 : f32
    %110 = vector.shape_cast %36 : vector<64x1xi1> to vector<64x1xi1>
    %111 = vector.broadcast %110 : vector<64x1xi1> to vector<64x128xi1>
    %112 = vector.broadcast %cst_37 : f32 to vector<64x128xf32>
    %113 = arith.select %111, %112, %109 : vector<64x128xi1>, vector<64x128xf32>
    %114 = arith.truncf %108 : vector<64x128xf32> to vector<64x128xbf16>
    %115 = arith.truncf %103 : vector<64x128xf32> to vector<64x128xbf16>
    %116 = arith.truncf %113 : vector<64x128xf32> to vector<64x128xbf16>
    %117 = tpu.concatenate %114, %115, %116 in 1 : vector<64x128xbf16>, vector<64x128xbf16>, vector<64x128xbf16> -> vector<64x384xbf16>
    %c0_38 = arith.constant 0 : index
    %c0_39 = arith.constant 0 : index
    %118 = vector.load %arg6[%c0_38, %c0_39] : memref<384x128xbf16, #tpu.memory_space<vmem>>, vector<384x128xbf16>
    %cst_40 = arith.constant dense<0.000000e+00> : vector<64x128xf32>
    %119 = tpu.matmul %117, %118, %cst_40 {dimension_numbers = #tpu.dot_dimension_numbers<[1], [0], [0], [1], [0, 0, 1, 1], [], []>} : vector<64x384xbf16>, vector<384x128xbf16>, vector<64x128xf32> -> vector<64x128xf32>
    %c0_41 = arith.constant 0 : index
    %c0_42 = arith.constant 0 : index
    %120 = vector.load %arg7[%c0_41, %c0_42] : memref<3x128xf32, #tpu.memory_space<vmem>>, vector<1x128xf32>
    %121 = vector.broadcast %120 : vector<1x128xf32> to vector<64x128xf32>
    %122 = arith.addf %119, %121 : vector<64x128xf32>
    %cst_43 = arith.constant dense<0.000000e+00> : vector<128xf32>
    %123 = vector.multi_reduction <add>, %122, %cst_43 [0] : vector<64x128xf32> to vector<128xf32>
    %124 = vector.shape_cast %123 : vector<128xf32> to vector<1x128xf32>
    %125 = arith.mulf %122, %122 : vector<64x128xf32>
    %cst_44 = arith.constant dense<0.000000e+00> : vector<128xf32>
    %126 = vector.multi_reduction <add>, %125, %cst_44 [0] : vector<64x128xf32> to vector<128xf32>
    %127 = vector.shape_cast %126 : vector<128xf32> to vector<1x128xf32>
    %128 = tpu.concatenate %124, %127 in 0 : vector<1x128xf32>, vector<1x128xf32> -> vector<2x128xf32>
    %c4_i32_45 = arith.constant 4 : i32
    %129 = tpu.dynamic_rotate %128 by %c4_i32_45 dim 1 : vector<2x128xf32>, i32 -> vector<2x128xf32>
    %130 = arith.addf %128, %129 : vector<2x128xf32>
    %c8_i32_46 = arith.constant 8 : i32
    %131 = tpu.dynamic_rotate %130 by %c8_i32_46 dim 1 : vector<2x128xf32>, i32 -> vector<2x128xf32>
    %132 = arith.addf %130, %131 : vector<2x128xf32>
    %c16_i32_47 = arith.constant 16 : i32
    %133 = tpu.dynamic_rotate %132 by %c16_i32_47 dim 1 : vector<2x128xf32>, i32 -> vector<2x128xf32>
    %134 = arith.addf %132, %133 : vector<2x128xf32>
    %c32_i32_48 = arith.constant 32 : i32
    %135 = tpu.dynamic_rotate %134 by %c32_i32_48 dim 1 : vector<2x128xf32>, i32 -> vector<2x128xf32>
    %136 = arith.addf %134, %135 : vector<2x128xf32>
    %c64_i32_49 = arith.constant 64 : i32
    %137 = tpu.dynamic_rotate %136 by %c64_i32_49 dim 1 : vector<2x128xf32>, i32 -> vector<2x128xf32>
    %138 = arith.addf %136, %137 : vector<2x128xf32>
    %139 = vector.extract_strided_slice %138 {offsets = [0, 0], sizes = [1, 128], strides = [1, 1]} : vector<2x128xf32> to vector<1x128xf32>
    %cst_50 = arith.constant 4.8828125E-4 : f32
    %140 = vector.broadcast %cst_50 : f32 to vector<1x128xf32>
    %141 = arith.mulf %139, %140 : vector<1x128xf32>
    %142 = vector.extract_strided_slice %138 {offsets = [1, 0], sizes = [1, 128], strides = [1, 1]} : vector<2x128xf32> to vector<1x128xf32>
    %cst_51 = arith.constant 4.8828125E-4 : f32
    %143 = vector.broadcast %cst_51 : f32 to vector<1x128xf32>
    %144 = arith.mulf %142, %143 : vector<1x128xf32>
    %145 = arith.mulf %141, %141 : vector<1x128xf32>
    %146 = arith.subf %144, %145 : vector<1x128xf32>
    %147 = vector.broadcast %141 : vector<1x128xf32> to vector<64x128xf32>
    %148 = arith.subf %122, %147 : vector<64x128xf32>
    %cst_52 = arith.constant 9.99999974E-6 : f32
    %149 = vector.broadcast %cst_52 : f32 to vector<1x128xf32>
    %150 = arith.addf %146, %149 : vector<1x128xf32>
    %151 = math.rsqrt %150 : vector<1x128xf32>
    %152 = vector.broadcast %151 : vector<1x128xf32> to vector<64x128xf32>
    %153 = arith.mulf %148, %152 : vector<64x128xf32>
    %c1_53 = arith.constant 1 : index
    %c0_54 = arith.constant 0 : index
    %154 = vector.load %arg7[%c1_53, %c0_54] : memref<3x128xf32, #tpu.memory_space<vmem>>, vector<1x128xf32>
    %155 = vector.broadcast %154 : vector<1x128xf32> to vector<64x128xf32>
    %156 = arith.mulf %153, %155 : vector<64x128xf32>
    %c2_55 = arith.constant 2 : index
    %c0_56 = arith.constant 0 : index
    %157 = vector.load %arg7[%c2_55, %c0_56] : memref<3x128xf32, #tpu.memory_space<vmem>>, vector<1x128xf32>
    %158 = vector.broadcast %157 : vector<1x128xf32> to vector<64x128xf32>
    %159 = arith.addf %156, %158 : vector<64x128xf32>
    %cst_57 = arith.constant 0.000000e+00 : f32
    %160 = vector.broadcast %cst_57 : f32 to vector<64x128xf32>
    %161 = arith.maximumf %159, %160 : vector<64x128xf32>
    %c0_58 = arith.constant 0 : index
    %c0_59 = arith.constant 0 : index
    %162 = vector.load %arg8[%c0_58, %c0_59] : memref<64x128xf32, #tpu.memory_space<vmem>>, vector<64x128xf32>
    tpu.vector_store %arg8[%c0_58, %c0_59], %161 {strides = array<i32>} : memref<64x128xf32, #tpu.memory_space<vmem>>, vector<64x128xf32>,
    return
  }
}

</mosaic_0001>

<llo_original>
// kernel: _decoder_block_impl.1
$region0: #{_decoder_block_impl.1}
  #allocation0 [shape = 'u32[]', space=smem, size = 0x4, offset = 0x4, fixed_abs, tag = 'smem constant byte address 0x4 - core index']
  #allocation1 [shape = 'u32[144,128]{1,0:T(1,128)}', space=vmem, size = 0x12000, scoped, tag = 'internal scratch']
  %s0 = inlined_call_operand.vmem [shape: bf16[64,256], index: 0, kind: input, shape index: {}]
  %s1 = inlined_call_operand.vmem [shape: bf16[64,256], index: 1, kind: input, shape index: {}]
  %s2 = inlined_call_operand.vmem [shape: bf16[256,256], index: 2, kind: input, shape index: {}]
  %s3 = inlined_call_operand.vmem [shape: f32[1,256], index: 3, kind: input, shape index: {}]
  %s4 = inlined_call_operand.vmem [shape: bf16[768,128], index: 4, kind: input, shape index: {}]
  %s5 = inlined_call_operand.vmem [shape: f32[3,128], index: 5, kind: input, shape index: {}]
  %s6 = inlined_call_operand.vmem [shape: bf16[384,128], index: 6, kind: input, shape index: {}]
  %s7 = inlined_call_operand.vmem [shape: f32[3,128], index: 7, kind: input, shape index: {}]
  %s8 = inlined_call_operand.vmem [shape: f32[64,128], index: 8, kind: output, shape index: {}]
  %s9 = sld [smem:[#allocation0]]
  $region42: #{_decoder_block_impl.1} parent=0
    _
  %s11 = ssub.s32 1, %s9
  %s12 = scalar_select 0, %s11, %s9
  // Predicated region
  $region2: #{_decoder_block_impl.1} parent=0 // pred_check
    _
  $region3: #{_decoder_block_impl.1} parent=0 // pred_check_branch
    %14 = sbr.rel (0) target = $region5
  $region4: #{_decoder_block_impl.1} parent=0 // pred_region
    _
  $region5: #{_decoder_block_impl.1} parent=0 // pred_fallthru
    _
  // Predicated region
  $region6: #{_decoder_block_impl.1} parent=0 // pred_check
    _
  $region7: #{_decoder_block_impl.1} parent=0 // pred_check_branch
    %16 = sbr.rel (0) target = $region9
  $region8: #{_decoder_block_impl.1} parent=0 // pred_region
    _
  $region9: #{_decoder_block_impl.1} parent=0 // pred_fallthru
    _
  // Predicated region
  $region10: #{_decoder_block_impl.1} parent=0 // pred_check
    _
  $region11: #{_decoder_block_impl.1} parent=0 // pred_check_branch
    %18 = sbr.rel (0) target = $region13
  $region12: #{_decoder_block_impl.1} parent=0 // pred_region
    _
  $region13: #{_decoder_block_impl.1} parent=0 // pred_fallthru
    _
  // Predicated region
  $region14: #{_decoder_block_impl.1} parent=0 // pred_check
    _
  $region15: #{_decoder_block_impl.1} parent=0 // pred_check_branch
    %20 = sbr.rel (0) target = $region17
  $region16: #{_decoder_block_impl.1} parent=0 // pred_region
    _
  $region17: #{_decoder_block_impl.1} parent=0 // pred_fallthru
    _
  // Predicated region
  $region18: #{_decoder_block_impl.1} parent=0 // pred_check
    _
  $region19: #{_decoder_block_impl.1} parent=0 // pred_check_branch
    %22 = sbr.rel (0) target = $region21
  $region20: #{_decoder_block_impl.1} parent=0 // pred_region
    _
  $region21: #{_decoder_block_impl.1} parent=0 // pred_fallthru
    _
  // Predicated region
  $region22: #{_decoder_block_impl.1} parent=0 // pred_check
    _
  $region23: #{_decoder_block_impl.1} parent=0 // pred_check_branch
    %24 = sbr.rel (0) target = $region25
  $region24: #{_decoder_block_impl.1} parent=0 // pred_region
    _
  $region25: #{_decoder_block_impl.1} parent=0 // pred_fallthru
    _
  // Predicated region
  $region26: #{_decoder_block_impl.1} parent=0 // pred_check
    _
  $region27: #{_decoder_block_impl.1} parent=0 // pred_check_branch
    %26 = sbr.rel (0) target = $region29
  $region28: #{_decoder_block_impl.1} parent=0 // pred_region
    _
  $region29: #{_decoder_block_impl.1} parent=0 // pred_fallthru
    _
  // Predicated region
  $region30: #{_decoder_block_impl.1} parent=0 // pred_check
    _
  $region31: #{_decoder_block_impl.1} parent=0 // pred_check_branch
    %28 = sbr.rel (0) target = $region33
  $region32: #{_decoder_block_impl.1} parent=0 // pred_region
    _
  $region33: #{_decoder_block_impl.1} parent=0 // pred_fallthru
    _
  %v30 = vlaneseq
  %v31 = vshrl.u32 %v30, 7
  %v32 = vadd.s32 %v31, 8
  %v33 = vadd.s32 %v31, 16
  %v34 = vadd.s32 %v31, 24
  %v35 = vadd.s32 %v31, 32
  %v36 = vadd.s32 %v31, 40
  %v37 = vadd.s32 %v31, 48
  %v38 = vadd.s32 %v31, 56
  %vm39 = vcmp.lt.s32.totalorder %v31, 0
  %v40 = vsub.s32 0, %v31
  %v41 = vsel %vm39, %v40, %v31
  %v42 = vshrl.u32 %v41, 5
  %v43 = vand.u32 %v41, 31
  %v44 = vsub.s32 0, %v43
  %v45 = vsel %vm39, %v44, %v43
  %vm46 = vcmp.lt.s32.totalorder %v32, 0
  %v47 = vsub.s32 0, %v32
  %v48 = vsel %vm46, %v47, %v32
  %v49 = vshrl.u32 %v48, 5
  %v50 = vand.u32 %v48, 31
  %v51 = vsub.s32 0, %v50
  %v52 = vsel %vm46, %v51, %v50
  %vm53 = vcmp.lt.s32.totalorder %v33, 0
  %v54 = vsub.s32 0, %v33
  %v55 = vsel %vm53, %v54, %v33
  %v56 = vshrl.u32 %v55, 5
  %v57 = vand.u32 %v55, 31
  %v58 = vsub.s32 0, %v57
  %v59 = vsel %vm53, %v58, %v57
  %vm60 = vcmp.lt.s32.totalorder %v34, 0
  %v61 = vsub.s32 0, %v34
  %v62 = vsel %vm60, %v61, %v34
  %v63 = vshrl.u32 %v62, 5
  %v64 = vand.u32 %v62, 31
  %v65 = vsub.s32 0, %v64
  %v66 = vsel %vm60, %v65, %v64
  %vm67 = vcmp.lt.s32.totalorder %v35, 0
  %v68 = vsub.s32 0, %v35
  %v69 = vsel %vm67, %v68, %v35
  %v70 = vshrl.u32 %v69, 5
  %v71 = vand.u32 %v69, 31
  %v72 = vsub.s32 0, %v71
  %v73 = vsel %vm67, %v72, %v71
  %vm74 = vcmp.lt.s32.totalorder %v36, 0
  %v75 = vsub.s32 0, %v36
  %v76 = vsel %vm74, %v75, %v36
  %v77 = vshrl.u32 %v76, 5
  %v78 = vand.u32 %v76, 31
  %v79 = vsub.s32 0, %v78
  %v80 = vsel %vm74, %v79, %v78
  %vm81 = vcmp.lt.s32.totalorder %v37, 0
  %v82 = vsub.s32 0, %v37
  %v83 = vsel %vm81, %v82, %v37
  %v84 = vshrl.u32 %v83, 5
  %v85 = vand.u32 %v83, 31
  %v86 = vsub.s32 0, %v85
  %v87 = vsel %vm81, %v86, %v85
  %vm88 = vcmp.lt.s32.totalorder %v38, 0
  %v89 = vsub.s32 0, %v38
  %v90 = vsel %vm88, %v89, %v38
  %v91 = vshrl.u32 %v90, 5
  %v92 = vand.u32 %v90, 31
  %v93 = vsub.s32 0, %v92
  %v94 = vsel %vm88, %v93, %v92
  %vm95 = vcmp.ne.s32.totalorder %v45, 0
  %vm96 = vcmp.ne.s32.totalorder %v52, 0
  %vm97 = vcmp.ne.s32.totalorder %v59, 0
  %vm98 = vcmp.ne.s32.totalorder %v66, 0
  %vm99 = vcmp.ne.s32.totalorder %v73, 0
  %vm100 = vcmp.ne.s32.totalorder %v80, 0
  %vm101 = vcmp.ne.s32.totalorder %v87, 0
  %vm102 = vcmp.ne.s32.totalorder %v94, 0
  %vm103 = vcmp.lt.s32.totalorder %v45, 0
  %vm104 = vcmp.lt.s32.totalorder %v52, 0
  %vm105 = vcmp.lt.s32.totalorder %v59, 0
  %vm106 = vcmp.lt.s32.totalorder %v66, 0
  %vm107 = vcmp.lt.s32.totalorder %v73, 0
  %vm108 = vcmp.lt.s32.totalorder %v80, 0
  %vm109 = vcmp.lt.s32.totalorder %v87, 0
  %vm110 = vcmp.lt.s32.totalorder %v94, 0
  %vm111 = vmand %vm103, %vm95
  %vm112 = vmand %vm104, %vm96
  %vm113 = vmand %vm105, %vm97
  %vm114 = vmand %vm106, %vm98
  %vm115 = vmand %vm107, %vm99
  %vm116 = vmand %vm108, %vm100
  %vm117 = vmand %vm109, %vm101
  %vm118 = vmand %vm110, %vm102
  %v119 = vadd.s32 %v45, 32
  %v120 = vadd.s32 %v52, 32
  %v121 = vadd.s32 %v59, 32
  %v122 = vadd.s32 %v66, 32
  %v123 = vadd.s32 %v73, 32
  %v124 = vadd.s32 %v80, 32
  %v125 = vadd.s32 %v87, 32
  %v126 = vadd.s32 %v94, 32
  %v127 = vsel %vm111, %v119, %v45
  %v128 = vsel %vm112, %v120, %v52
  %v129 = vsel %vm113, %v121, %v59
  %v130 = vsel %vm114, %v122, %v66
  %v131 = vsel %vm115, %v123, %v73
  %v132 = vsel %vm116, %v124, %v80
  %v133 = vsel %vm117, %v125, %v87
  %v134 = vsel %vm118, %v126, %v94
  %vm135 = vcmp.eq.s32.totalorder %v127, 0
  %vm136 = vcmp.eq.s32.totalorder %v128, 0
  %vm137 = vcmp.eq.s32.totalorder %v129, 0
  %vm138 = vcmp.eq.s32.totalorder %v130, 0
  %vm139 = vcmp.eq.s32.totalorder %v131, 0
  %vm140 = vcmp.eq.s32.totalorder %v132, 0
  %vm141 = vcmp.eq.s32.totalorder %v133, 0
  %vm142 = vcmp.eq.s32.totalorder %v134, 0
  %vm143 = vcmp.eq.s32.totalorder %v127, 31
  %vm144 = vcmp.eq.s32.totalorder %v128, 31
  %vm145 = vcmp.eq.s32.totalorder %v129, 31
  %vm146 = vcmp.eq.s32.totalorder %v130, 31
  %vm147 = vcmp.eq.s32.totalorder %v131, 31
  %vm148 = vcmp.eq.s32.totalorder %v132, 31
  %vm149 = vcmp.eq.s32.totalorder %v133, 31
  %vm150 = vcmp.eq.s32.totalorder %v134, 31
  %v151 = vld [vmem:[%s0] sm:$0xff]
  %v152 = vld [vmem:[%s0 + $0x8] sm:$0xff]
  %v153 = vld [vmem:[%s0 + $0x10] sm:$0xff]
  %v154 = vld [vmem:[%s0 + $0x18] sm:$0xff]
  %v155 = vld [vmem:[%s0 + $0x20] sm:$0xff]
  %v156 = vld [vmem:[%s0 + $0x28] sm:$0xff]
  %v157 = vld [vmem:[%s0 + $0x30] sm:$0xff]
  %v158 = vld [vmem:[%s0 + $0x38] sm:$0xff]
  %v159 = vld [vmem:[%s2] sm:$0xff]
  %v160 = vld [vmem:[%s2 + $0x8] sm:$0xff]
  %v161 = vld [vmem:[%s2 + $0x10] sm:$0xff]
  %v162 = vld [vmem:[%s2 + $0x18] sm:$0xff]
  %v163 = vld [vmem:[%s2 + $0x20] sm:$0xff]
  %v164 = vld [vmem:[%s2 + $0x28] sm:$0xff]
  %v165 = vld [vmem:[%s2 + $0x30] sm:$0xff]
  %v166 = vld [vmem:[%s2 + $0x38] sm:$0xff]
  %v167 = vld [vmem:[%s2 + $0x40] sm:$0xff]
  %v168 = vld [vmem:[%s2 + $0x48] sm:$0xff]
  %v169 = vld [vmem:[%s2 + $0x50] sm:$0xff]
  %v170 = vld [vmem:[%s2 + $0x58] sm:$0xff]
  %v171 = vld [vmem:[%s2 + $0x60] sm:$0xff]
  %v172 = vld [vmem:[%s2 + $0x68] sm:$0xff]
  %v173 = vld [vmem:[%s2 + $0x70] sm:$0xff]
  %v174 = vld [vmem:[%s2 + $0x78] sm:$0xff]
  %v175 = vld [vmem:[%s2 + $0x80] sm:$0xff]
  %v176 = vld [vmem:[%s2 + $0x88] sm:$0xff]
  %v177 = vld [vmem:[%s2 + $0x90] sm:$0xff]
  %v178 = vld [vmem:[%s2 + $0x98] sm:$0xff]
  %v179 = vld [vmem:[%s2 + $0xa0] sm:$0xff]
  %v180 = vld [vmem:[%s2 + $0xa8] sm:$0xff]
  %v181 = vld [vmem:[%s2 + $0xb0] sm:$0xff]
  %v182 = vld [vmem:[%s2 + $0xb8] sm:$0xff]
  %v183 = vld [vmem:[%s2 + $0xc0] sm:$0xff]
  %v184 = vld [vmem:[%s2 + $0xc8] sm:$0xff]
  %v185 = vld [vmem:[%s2 + $0xd0] sm:$0xff]
  %v186 = vld [vmem:[%s2 + $0xd8] sm:$0xff]
  %v187 = vld [vmem:[%s2 + $0xe0] sm:$0xff]
  %v188 = vld [vmem:[%s2 + $0xe8] sm:$0xff]
  %v189 = vld [vmem:[%s2 + $0xf0] sm:$0xff]
  %v190 = vld [vmem:[%s2 + $0xf8] sm:$0xff]
  %v191 = vld [vmem:[%s3] sm:$0x3]
  %v193 = vlaneseq
  %v194 = vshrl.u32 %v193, 7
  %v195 = vsub.s32 0, %v194
  %v196 = vrot.slane %v191, %v195
  %v197 = vlaneseq
  %v198 = vshrl.u32 %v197, 7
  %v199 = vsub.s32 1, %v198
  %v200 = vrot.slane %v191, %v199
  %v211 = vunpack.c.l.b16 %v151
  %v212 = vunpack.c.h.b16 %v151
  %v213 = vunpack.c.l.b16 %v152
  %v214 = vunpack.c.h.b16 %v152
  %v215 = vunpack.c.l.b16 %v153
  %v216 = vunpack.c.h.b16 %v153
  %v217 = vunpack.c.l.b16 %v154
  %v218 = vunpack.c.h.b16 %v154
  %v219 = vunpack.c.l.b16 %v155
  %v220 = vunpack.c.h.b16 %v155
  %v221 = vunpack.c.l.b16 %v156
  %v222 = vunpack.c.h.b16 %v156
  %v223 = vunpack.c.l.b16 %v157
  %v224 = vunpack.c.h.b16 %v157
  %v225 = vunpack.c.l.b16 %v158
  %v226 = vunpack.c.h.b16 %v158
  %v227 = vpack.c.b16 %v213, %v211
  %v228 = vpack.c.b16 %v214, %v212
  %v229 = vpack.c.b16 %v217, %v215
  %v230 = vpack.c.b16 %v218, %v216
  %v231 = vpack.c.b16 %v221, %v219
  %v232 = vpack.c.b16 %v222, %v220
  %v233 = vpack.c.b16 %v225, %v223
  %v234 = vpack.c.b16 %v226, %v224
  %v275 = vunpack.c.l.b16 %v159
  %v276 = vunpack.c.h.b16 %v159
  %v277 = vunpack.c.l.b16 %v160
  %v278 = vunpack.c.h.b16 %v160
  %v279 = vunpack.c.l.b16 %v161
  %v280 = vunpack.c.h.b16 %v161
  %v281 = vunpack.c.l.b16 %v162
  %v282 = vunpack.c.h.b16 %v162
  %v283 = vunpack.c.l.b16 %v163
  %v284 = vunpack.c.h.b16 %v163
  %v285 = vunpack.c.l.b16 %v164
  %v286 = vunpack.c.h.b16 %v164
  %v287 = vunpack.c.l.b16 %v165
  %v288 = vunpack.c.h.b16 %v165
  %v289 = vunpack.c.l.b16 %v166
  %v290 = vunpack.c.h.b16 %v166
  %v291 = vunpack.c.l.b16 %v167
  %v292 = vunpack.c.h.b16 %v167
  %v293 = vunpack.c.l.b16 %v168
  %v294 = vunpack.c.h.b16 %v168
  %v295 = vunpack.c.l.b16 %v169
  %v296 = vunpack.c.h.b16 %v169
  %v297 = vunpack.c.l.b16 %v170
  %v298 = vunpack.c.h.b16 %v170
  %v299 = vunpack.c.l.b16 %v171
  %v300 = vunpack.c.h.b16 %v171
  %v301 = vunpack.c.l.b16 %v172
  %v302 = vunpack.c.h.b16 %v172
  %v303 = vunpack.c.l.b16 %v173
  %v304 = vunpack.c.h.b16 %v173
  %v305 = vunpack.c.l.b16 %v174
  %v306 = vunpack.c.h.b16 %v174
  %v307 = vunpack.c.l.b16 %v175
  %v308 = vunpack.c.h.b16 %v175
  %v309 = vunpack.c.l.b16 %v176
  %v310 = vunpack.c.h.b16 %v176
  %v311 = vunpack.c.l.b16 %v177
  %v312 = vunpack.c.h.b16 %v177
  %v313 = vunpack.c.l.b16 %v178
  %v314 = vunpack.c.h.b16 %v178
  %v315 = vunpack.c.l.b16 %v179
  %v316 = vunpack.c.h.b16 %v179
  %v317 = vunpack.c.l.b16 %v180
  %v318 = vunpack.c.h.b16 %v180
  %v319 = vunpack.c.l.b16 %v181
  %v320 = vunpack.c.h.b16 %v181
  %v321 = vunpack.c.l.b16 %v182
  %v322 = vunpack.c.h.b16 %v182
  %v323 = vunpack.c.l.b16 %v183
  %v324 = vunpack.c.h.b16 %v183
  %v325 = vunpack.c.l.b16 %v184
  %v326 = vunpack.c.h.b16 %v184
  %v327 = vunpack.c.l.b16 %v185
  %v328 = vunpack.c.h.b16 %v185
  %v329 = vunpack.c.l.b16 %v186
  %v330 = vunpack.c.h.b16 %v186
  %v331 = vunpack.c.l.b16 %v187
  %v332 = vunpack.c.h.b16 %v187
  %v333 = vunpack.c.l.b16 %v188
  %v334 = vunpack.c.h.b16 %v188
  %v335 = vunpack.c.l.b16 %v189
  %v336 = vunpack.c.h.b16 %v189
  %v337 = vunpack.c.l.b16 %v190
  %v338 = vunpack.c.h.b16 %v190
  %v339 = vpack.c.b16 %v277, %v275
  %v340 = vpack.c.b16 %v278, %v276
  %v341 = vpack.c.b16 %v281, %v279
  %v342 = vpack.c.b16 %v282, %v280
  %v343 = vpack.c.b16 %v285, %v283
  %v344 = vpack.c.b16 %v286, %v284
  %v345 = vpack.c.b16 %v289, %v287
  %v346 = vpack.c.b16 %v290, %v288
  %v347 = vpack.c.b16 %v293, %v291
  %v348 = vpack.c.b16 %v294, %v292
  %v349 = vpack.c.b16 %v297, %v295
  %v350 = vpack.c.b16 %v298, %v296
  %v351 = vpack.c.b16 %v301, %v299
  %v352 = vpack.c.b16 %v302, %v300
  %v353 = vpack.c.b16 %v305, %v303
  %v354 = vpack.c.b16 %v306, %v304
  %v355 = vpack.c.b16 %v309, %v307
  %v356 = vpack.c.b16 %v310, %v308
  %v357 = vpack.c.b16 %v313, %v311
  %v358 = vpack.c.b16 %v314, %v312
  %v359 = vpack.c.b16 %v317, %v315
  %v360 = vpack.c.b16 %v318, %v316
  %v361 = vpack.c.b16 %v321, %v319
  %v362 = vpack.c.b16 %v322, %v320
  %v363 = vpack.c.b16 %v325, %v323
  %v364 = vpack.c.b16 %v326, %v324
  %v365 = vpack.c.b16 %v329, %v327
  %v366 = vpack.c.b16 %v330, %v328
  %v367 = vpack.c.b16 %v333, %v331
  %v368 = vpack.c.b16 %v334, %v332
  %v369 = vpack.c.b16 %v337, %v335
  %v370 = vpack.c.b16 %v338, %v336
  %403 = vmatprep.subr.bf16.mxu0 %v340
  %404 = vmatpush1.bf16.msra.mxu0 %v339
  %405 = vmatprep.subr.bf16.mxu0 %v342
  %406 = vmatpush1.bf16.msra.mxu0 %v341
  %407 = vmatprep.subr.bf16.mxu0 %v344
  %408 = vmatpush1.bf16.msra.mxu0 %v343
  %409 = vmatprep.subr.bf16.mxu0 %v346
  %410 = vmatpush1.bf16.msra.mxu0 %v345
  %411 = vmatprep.subr.bf16.mxu0 %v348
  %412 = vmatpush1.bf16.msra.mxu0 %v347
  %413 = vmatprep.subr.bf16.mxu0 %v350
  %414 = vmatpush1.bf16.msra.mxu0 %v349
  %415 = vmatprep.subr.bf16.mxu0 %v352
  %416 = vmatpush1.bf16.msra.mxu0 %v351
  %417 = vmatprep.subr.bf16.mxu0 %v354
  %418 = vmatpush1.bf16.msra.mxu0 %v353
  %419 = vmatprep.subr.bf16.mxu0 %v356
  %420 = vmatpush1.bf16.msra.mxu0 %v355
  %421 = vmatprep.subr.bf16.mxu0 %v358
  %422 = vmatpush1.bf16.msra.mxu0 %v357
  %423 = vmatprep.subr.bf16.mxu0 %v360
  %424 = vmatpush1.bf16.msra.mxu0 %v359
  %425 = vmatprep.subr.bf16.mxu0 %v362
  %426 = vmatpush1.bf16.msra.mxu0 %v361
  %427 = vmatprep.subr.bf16.mxu0 %v364
  %428 = vmatpush1.bf16.msra.mxu0 %v363
  %429 = vmatprep.subr.bf16.mxu0 %v366
  %430 = vmatpush1.bf16.msra.mxu0 %v365
  %431 = vmatprep.subr.bf16.mxu0 %v368
  %432 = vmatpush1.bf16.msra.mxu0 %v367
  %433 = vmatprep.subr.bf16.mxu0 %v370
  %434 = vmatpush1.bf16.msra.mxu0 %v369
  %435 = vmatprep.mubr.bf16.mxu0 %v228
  %436 = vmatmul.mubr.bf16.gmra.mrb[0].mxu0 %v227
  %v437 = vpop.f32.mrb[0].mxu0
  %v438 = vadd.f32 %v196, %v437
  %v439 = vpop.f32.mrb[0].mxu0
  %v440 = vadd.f32 %v200, %v439
  %v441 = vpop.f32.mrb[0].mxu0
  %v442 = vadd.f32 %v196, %v441
  %v443 = vpop.f32.mrb[0].mxu0
  %v444 = vadd.f32 %v200, %v443
  %445 = vmatprep.mubr.bf16.mxu0 %v230
  %446 = vmatmul.mubr.bf16.gmra.mrb[0].mxu0 %v229
  %v447 = vpop.f32.mrb[0].mxu0
  %v448 = vadd.f32 %v196, %v447
  %v449 = vpop.f32.mrb[0].mxu0
  %v450 = vadd.f32 %v200, %v449
  %v451 = vpop.f32.mrb[0].mxu0
  %v452 = vadd.f32 %v196, %v451
  %v453 = vpop.f32.mrb[0].mxu0
  %v454 = vadd.f32 %v200, %v453
  %455 = vmatprep.mubr.bf16.mxu0 %v232
  %456 = vmatmul.mubr.bf16.gmra.mrb[0].mxu0 %v231
  %v457 = vpop.f32.mrb[0].mxu0
  %v458 = vadd.f32 %v196, %v457
  %v459 = vpop.f32.mrb[0].mxu0
  %v460 = vadd.f32 %v200, %v459
  %v461 = vpop.f32.mrb[0].mxu0
  %v462 = vadd.f32 %v196, %v461
  %v463 = vpop.f32.mrb[0].mxu0
  %v464 = vadd.f32 %v200, %v463
  %465 = vmatprep.mubr.bf16.mxu0 %v234
  %466 = vmatmul.mubr.bf16.gmra.mrb[0].mxu0 %v233
  %v467 = vpop.f32.mrb[0].mxu0
  %v468 = vadd.f32 %v196, %v467
  %v469 = vpop.f32.mrb[0].mxu0
  %v470 = vadd.f32 %v200, %v469
  %v471 = vpop.f32.mrb[0].mxu0
  %v472 = vadd.f32 %v196, %v471
  %v473 = vpop.f32.mrb[0].mxu0
  %v474 = vadd.f32 %v200, %v473
  %475 = vdwg.mxu0
  %v476 = vld [vmem:[%s1] sm:$0xff]
  %v477 = vld [vmem:[%s1 + $0x8] sm:$0xff]
  %v478 = vld [vmem:[%s1 + $0x10] sm:$0xff]
  %v479 = vld [vmem:[%s1 + $0x18] sm:$0xff]
  %v480 = vld [vmem:[%s1 + $0x20] sm:$0xff]
  %v481 = vld [vmem:[%s1 + $0x28] sm:$0xff]
  %v482 = vld [vmem:[%s1 + $0x30] sm:$0xff]
  %v483 = vld [vmem:[%s1 + $0x38] sm:$0xff]
  %v484 = vunpack.c.l.bf16 %v476
  %v485 = vunpack.c.h.bf16 %v476
  %v486 = vunpack.c.l.bf16 %v477
  %v487 = vunpack.c.h.bf16 %v477
  %v488 = vunpack.c.l.bf16 %v478
  %v489 = vunpack.c.h.bf16 %v478
  %v490 = vunpack.c.l.bf16 %v479
  %v491 = vunpack.c.h.bf16 %v479
  %v492 = vunpack.c.l.bf16 %v480
  %v493 = vunpack.c.h.bf16 %v480
  %v494 = vunpack.c.l.bf16 %v481
  %v495 = vunpack.c.h.bf16 %v481
  %v496 = vunpack.c.l.bf16 %v482
  %v497 = vunpack.c.h.bf16 %v482
  %v498 = vunpack.c.l.bf16 %v483
  %v499 = vunpack.c.h.bf16 %v483
  %v500 = vadd.f32 %v438, %v484
  %v501 = vadd.f32 %v440, %v485
  %v502 = vadd.f32 %v442, %v486
  %v503 = vadd.f32 %v444, %v487
  %v504 = vadd.f32 %v448, %v488
  %v505 = vadd.f32 %v450, %v489
  %v506 = vadd.f32 %v452, %v490
  %v507 = vadd.f32 %v454, %v491
  %v508 = vadd.f32 %v458, %v492
  %v509 = vadd.f32 %v460, %v493
  %v510 = vadd.f32 %v462, %v494
  %v511 = vadd.f32 %v464, %v495
  %v512 = vadd.f32 %v468, %v496
  %v513 = vadd.f32 %v470, %v497
  %v514 = vadd.f32 %v472, %v498
  %v515 = vadd.f32 %v474, %v499
  %v516 = vrot.slane %v500, 7
  %v517 = vrot.slane %v501, 7
  %v518 = vrot.slane %v502, 7
  %v519 = vrot.slane %v503, 7
  %v520 = vrot.slane %v504, 7
  %v521 = vrot.slane %v505, 7
  %v522 = vrot.slane %v506, 7
  %v523 = vrot.slane %v507, 7
  %v524 = vrot.slane %v508, 7
  %v525 = vrot.slane %v509, 7
  %v526 = vrot.slane %v510, 7
  %v527 = vrot.slane %v511, 7
  %v528 = vrot.slane %v512, 7
  %v529 = vrot.slane %v513, 7
  %v530 = vrot.slane %v514, 7
  %v531 = vrot.slane %v515, 7
  %vm532 = vcmp.lt.s32.totalorder %v31, 1
  %v533 = vsel %vm532, %v528, %v530
  %v534 = vsel %vm532, %v529, %v531
  %v535 = vsel %vm532, %v526, %v528
  %v536 = vsel %vm532, %v527, %v529
  %v537 = vsel %vm532, %v524, %v526
  %v538 = vsel %vm532, %v525, %v527
  %v539 = vsel %vm532, %v522, %v524
  %v540 = vsel %vm532, %v523, %v525
  %v541 = vsel %vm532, %v520, %v522
  %v542 = vsel %vm532, %v521, %v523
  %v543 = vsel %vm532, %v518, %v520
  %v544 = vsel %vm532, %v519, %v521
  %v545 = vsel %vm532, %v516, %v518
  %v546 = vsel %vm532, %v517, %v519
  %v547 = vsel %vm532, %v530, %v516
  %v548 = vsel %vm532, %v531, %v517
  %v549 = vsel %vm135, 1, 0
  %v550 = vsel %vm136, 1, 0
  %v551 = vsel %vm137, 1, 0
  %v552 = vsel %vm138, 1, 0
  %v553 = vsel %vm139, 1, 0
  %v554 = vsel %vm140, 1, 0
  %v555 = vsel %vm141, 1, 0
  %v556 = vsel %vm142, 1, 0
  %vm557 = vcmp.eq.s32.totalorder %v549, 1
  %vm558 = vcmp.eq.s32.totalorder %v550, 1
  %vm559 = vcmp.eq.s32.totalorder %v551, 1
  %vm560 = vcmp.eq.s32.totalorder %v552, 1
  %vm561 = vcmp.eq.s32.totalorder %v553, 1
  %vm562 = vcmp.eq.s32.totalorder %v554, 1
  %vm563 = vcmp.eq.s32.totalorder %v555, 1
  %vm564 = vcmp.eq.s32.totalorder %v556, 1
  %v565 = vsel %vm557, 0.0, %v547
  %v566 = vsel %vm557, 0.0, %v548
  %v567 = vsel %vm558, 0.0, %v545
  %v568 = vsel %vm558, 0.0, %v546
  %v569 = vsel %vm559, 0.0, %v543
  %v570 = vsel %vm559, 0.0, %v544
  %v571 = vsel %vm560, 0.0, %v541
  %v572 = vsel %vm560, 0.0, %v542
  %v573 = vsel %vm561, 0.0, %v539
  %v574 = vsel %vm561, 0.0, %v540
  %v575 = vsel %vm562, 0.0, %v537
  %v576 = vsel %vm562, 0.0, %v538
  %v577 = vsel %vm563, 0.0, %v535
  %v578 = vsel %vm563, 0.0, %v536
  %v579 = vsel %vm564, 0.0, %v533
  %v580 = vsel %vm564, 0.0, %v534
  %v581 = vrot.slane %v500, 1
  %v582 = vrot.slane %v501, 1
  %v583 = vrot.slane %v502, 1
  %v584 = vrot.slane %v503, 1
  %v585 = vrot.slane %v504, 1
  %v586 = vrot.slane %v505, 1
  %v587 = vrot.slane %v506, 1
  %v588 = vrot.slane %v507, 1
  %v589 = vrot.slane %v508, 1
  %v590 = vrot.slane %v509, 1
  %v591 = vrot.slane %v510, 1
  %v592 = vrot.slane %v511, 1
  %v593 = vrot.slane %v512, 1
  %v594 = vrot.slane %v513, 1
  %v595 = vrot.slane %v514, 1
  %v596 = vrot.slane %v515, 1
  %vm597 = vcmp.lt.s32.totalorder %v31, 7
  %v598 = vsel %vm597, %v593, %v595
  %v599 = vsel %vm597, %v594, %v596
  %v600 = vsel %vm597, %v591, %v593
  %v601 = vsel %vm597, %v592, %v594
  %v602 = vsel %vm597, %v589, %v591
  %v603 = vsel %vm597, %v590, %v592
  %v604 = vsel %vm597, %v587, %v589
  %v605 = vsel %vm597, %v588, %v590
  %v606 = vsel %vm597, %v585, %v587
  %v607 = vsel %vm597, %v586, %v588
  %v608 = vsel %vm597, %v583, %v585
  %v609 = vsel %vm597, %v584, %v586
  %v610 = vsel %vm597, %v581, %v583
  %v611 = vsel %vm597, %v582, %v584
  %v612 = vsel %vm597, %v595, %v581
  %v613 = vsel %vm597, %v596, %v582
  %v614 = vsel %vm143, 1, 0
  %v615 = vsel %vm144, 1, 0
  %v616 = vsel %vm145, 1, 0
  %v617 = vsel %vm146, 1, 0
  %v618 = vsel %vm147, 1, 0
  %v619 = vsel %vm148, 1, 0
  %v620 = vsel %vm149, 1, 0
  %v621 = vsel %vm150, 1, 0
  %vm622 = vcmp.eq.s32.totalorder %v614, 1
  %vm623 = vcmp.eq.s32.totalorder %v615, 1
  %vm624 = vcmp.eq.s32.totalorder %v616, 1
  %vm625 = vcmp.eq.s32.totalorder %v617, 1
  %vm626 = vcmp.eq.s32.totalorder %v618, 1
  %vm627 = vcmp.eq.s32.totalorder %v619, 1
  %vm628 = vcmp.eq.s32.totalorder %v620, 1
  %vm629 = vcmp.eq.s32.totalorder %v621, 1
  %v630 = vsel %vm622, 0.0, %v610
  %v631 = vsel %vm622, 0.0, %v611
  %v632 = vsel %vm623, 0.0, %v608
  %v633 = vsel %vm623, 0.0, %v609
  %v634 = vsel %vm624, 0.0, %v606
  %v635 = vsel %vm624, 0.0, %v607
  %v636 = vsel %vm625, 0.0, %v604
  %v637 = vsel %vm625, 0.0, %v605
  %v638 = vsel %vm626, 0.0, %v602
  %v639 = vsel %vm626, 0.0, %v603
  %v640 = vsel %vm627, 0.0, %v600
  %v641 = vsel %vm627, 0.0, %v601
  %v642 = vsel %vm628, 0.0, %v598
  %v643 = vsel %vm628, 0.0, %v599
  %v644 = vsel %vm629, 0.0, %v612
  %v645 = vsel %vm629, 0.0, %v613
  %v646 = vpack.c.bf16 %v567, %v565
  %v647 = vpack.c.bf16 %v568, %v566
  %v648 = vpack.c.bf16 %v571, %v569
  %v649 = vpack.c.bf16 %v572, %v570
  %v650 = vpack.c.bf16 %v575, %v573
  %v651 = vpack.c.bf16 %v576, %v574
  %v652 = vpack.c.bf16 %v579, %v577
  %v653 = vpack.c.bf16 %v580, %v578
  %v654 = vpack.c.bf16 %v502, %v500
  %v655 = vpack.c.bf16 %v503, %v501
  %v656 = vpack.c.bf16 %v506, %v504
  %v657 = vpack.c.bf16 %v507, %v505
  %v658 = vpack.c.bf16 %v510, %v508
  %v659 = vpack.c.bf16 %v511, %v509
  %v660 = vpack.c.bf16 %v514, %v512
  %v661 = vpack.c.bf16 %v515, %v513
  %v662 = vpack.c.bf16 %v632, %v630
  %v663 = vpack.c.bf16 %v633, %v631
  %v664 = vpack.c.bf16 %v636, %v634
  %v665 = vpack.c.bf16 %v637, %v635
  %v666 = vpack.c.bf16 %v640, %v638
  %v667 = vpack.c.bf16 %v641, %v639
  %v668 = vpack.c.bf16 %v644, %v642
  %v669 = vpack.c.bf16 %v645, %v643
  %v670 = vld [vmem:[%s4] sm:$0xf]
  %v671 = vld [vmem:[%s4 + $0x4] sm:$0xf]
  %v672 = vld [vmem:[%s4 + $0x8] sm:$0xf]
  %v673 = vld [vmem:[%s4 + $0xc] sm:$0xf]
  %v674 = vld [vmem:[%s4 + $0x10] sm:$0xf]
  %v675 = vld [vmem:[%s4 + $0x14] sm:$0xf]
  %v676 = vld [vmem:[%s4 + $0x18] sm:$0xf]
  %v677 = vld [vmem:[%s4 + $0x1c] sm:$0xf]
  %v678 = vld [vmem:[%s4 + $0x20] sm:$0xf]
  %v679 = vld [vmem:[%s4 + $0x24] sm:$0xf]
  %v680 = vld [vmem:[%s4 + $0x28] sm:$0xf]
  %v681 = vld [vmem:[%s4 + $0x2c] sm:$0xf]
  %v682 = vld [vmem:[%s4 + $0x30] sm:$0xf]
  %v683 = vld [vmem:[%s4 + $0x34] sm:$0xf]
  %v684 = vld [vmem:[%s4 + $0x38] sm:$0xf]
  %v685 = vld [vmem:[%s4 + $0x3c] sm:$0xf]
  %v686 = vld [vmem:[%s4 + $0x40] sm:$0xf]
  %v687 = vld [vmem:[%s4 + $0x44] sm:$0xf]
  %v688 = vld [vmem:[%s4 + $0x48] sm:$0xf]
  %v689 = vld [vmem:[%s4 + $0x4c] sm:$0xf]
  %v690 = vld [vmem:[%s4 + $0x50] sm:$0xf]
  %v691 = vld [vmem:[%s4 + $0x54] sm:$0xf]
  %v692 = vld [vmem:[%s4 + $0x58] sm:$0xf]
  %v693 = vld [vmem:[%s4 + $0x5c] sm:$0xf]
  %v694 = vld [vmem:[%s4 + $0x60] sm:$0xf]
  %v695 = vld [vmem:[%s4 + $0x64] sm:$0xf]
  %v696 = vld [vmem:[%s4 + $0x68] sm:$0xf]
  %v697 = vld [vmem:[%s4 + $0x6c] sm:$0xf]
  %v698 = vld [vmem:[%s4 + $0x70] sm:$0xf]
  %v699 = vld [vmem:[%s4 + $0x74] sm:$0xf]
  %v700 = vld [vmem:[%s4 + $0x78] sm:$0xf]
  %v701 = vld [vmem:[%s4 + $0x7c] sm:$0xf]
  %v702 = vld [vmem:[%s4 + $0x80] sm:$0xf]
  %v703 = vld [vmem:[%s4 + $0x84] sm:$0xf]
  %v704 = vld [vmem:[%s4 + $0x88] sm:$0xf]
  %v705 = vld [vmem:[%s4 + $0x8c] sm:$0xf]
  %v706 = vld [vmem:[%s4 + $0x90] sm:$0xf]
  %v707 = vld [vmem:[%s4 + $0x94] sm:$0xf]
  %v708 = vld [vmem:[%s4 + $0x98] sm:$0xf]
  %v709 = vld [vmem:[%s4 + $0x9c] sm:$0xf]
  %v710 = vld [vmem:[%s4 + $0xa0] sm:$0xf]
  %v711 = vld [vmem:[%s4 + $0xa4] sm:$0xf]
  %v712 = vld [vmem:[%s4 + $0xa8] sm:$0xf]
  %v713 = vld [vmem:[%s4 + $0xac] sm:$0xf]
  %v714 = vld [vmem:[%s4 + $0xb0] sm:$0xf]
  %v715 = vld [vmem:[%s4 + $0xb4] sm:$0xf]
  %v716 = vld [vmem:[%s4 + $0xb8] sm:$0xf]
  %v717 = vld [vmem:[%s4 + $0xbc] sm:$0xf]
  %v718 = vld [vmem:[%s4 + $0xc0] sm:$0xf]
  %v719 = vld [vmem:[%s4 + $0xc4] sm:$0xf]
  %v720 = vld [vmem:[%s4 + $0xc8] sm:$0xf]
  %v721 = vld [vmem:[%s4 + $0xcc] sm:$0xf]
  %v722 = vld [vmem:[%s4 + $0xd0] sm:$0xf]
  %v723 = vld [vmem:[%s4 + $0xd4] sm:$0xf]
  %v724 = vld [vmem:[%s4 + $0xd8] sm:$0xf]
  %v725 = vld [vmem:[%s4 + $0xdc] sm:$0xf]
  %v726 = vld [vmem:[%s4 + $0xe0] sm:$0xf]
  %v727 = vld [vmem:[%s4 + $0xe4] sm:$0xf]
  %v728 = vld [vmem:[%s4 + $0xe8] sm:$0xf]
  %v729 = vld [vmem:[%s4 + $0xec] sm:$0xf]
  %v730 = vld [vmem:[%s4 + $0xf0] sm:$0xf]
  %v731 = vld [vmem:[%s4 + $0xf4] sm:$0xf]
  %v732 = vld [vmem:[%s4 + $0xf8] sm:$0xf]
  %v733 = vld [vmem:[%s4 + $0xfc] sm:$0xf]
  %v734 = vld [vmem:[%s4 + $0x100] sm:$0xf]
  %v735 = vld [vmem:[%s4 + $0x104] sm:$0xf]
  %v736 = vld [vmem:[%s4 + $0x108] sm:$0xf]
  %v737 = vld [vmem:[%s4 + $0x10c] sm:$0xf]
  %v738 = vld [vmem:[%s4 + $0x110] sm:$0xf]
  %v739 = vld [vmem:[%s4 + $0x114] sm:$0xf]
  %v740 = vld [vmem:[%s4 + $0x118] sm:$0xf]
  %v741 = vld [vmem:[%s4 + $0x11c] sm:$0xf]
  %v742 = vld [vmem:[%s4 + $0x120] sm:$0xf]
  %v743 = vld [vmem:[%s4 + $0x124] sm:$0xf]
  %v744 = vld [vmem:[%s4 + $0x128] sm:$0xf]
  %v745 = vld [vmem:[%s4 + $0x12c] sm:$0xf]
  %v746 = vld [vmem:[%s4 + $0x130] sm:$0xf]
  %v747 = vld [vmem:[%s4 + $0x134] sm:$0xf]
  %v748 = vld [vmem:[%s4 + $0x138] sm:$0xf]
  %v749 = vld [vmem:[%s4 + $0x13c] sm:$0xf]
  %v750 = vld [vmem:[%s4 + $0x140] sm:$0xf]
  %v751 = vld [vmem:[%s4 + $0x144] sm:$0xf]
  %v752 = vld [vmem:[%s4 + $0x148] sm:$0xf]
  %v753 = vld [vmem:[%s4 + $0x14c] sm:$0xf]
  %v754 = vld [vmem:[%s4 + $0x150] sm:$0xf]
  %v755 = vld [vmem:[%s4 + $0x154] sm:$0xf]
  %v756 = vld [vmem:[%s4 + $0x158] sm:$0xf]
  %v757 = vld [vmem:[%s4 + $0x15c] sm:$0xf]
  %v758 = vld [vmem:[%s4 + $0x160] sm:$0xf]
  %v759 = vld [vmem:[%s4 + $0x164] sm:$0xf]
  %v760 = vld [vmem:[%s4 + $0x168] sm:$0xf]
  %v761 = vld [vmem:[%s4 + $0x16c] sm:$0xf]
  %v762 = vld [vmem:[%s4 + $0x170] sm:$0xf]
  %v763 = vld [vmem:[%s4 + $0x174] sm:$0xf]
  %v764 = vld [vmem:[%s4 + $0x178] sm:$0xf]
  %v765 = vld [vmem:[%s4 + $0x17c] sm:$0xf]
  %v766 = vld [vmem:[%s5] sm:$0x1]
  %v767 = vlaneseq
  %v768 = vshrl.u32 %v767, 7
  %v769 = vsub.s32 0, %v768
  %v770 = vrot.slane %v766, %v769
  %v867 = vunpack.c.l.b16 %v670
  %v868 = vunpack.c.l.b16 %v671
  %v869 = vunpack.c.l.b16 %v672
  %v870 = vunpack.c.l.b16 %v673
  %v871 = vunpack.c.l.b16 %v674
  %v872 = vunpack.c.l.b16 %v675
  %v873 = vunpack.c.l.b16 %v676
  %v874 = vunpack.c.l.b16 %v677
  %v875 = vunpack.c.l.b16 %v678
  %v876 = vunpack.c.l.b16 %v679
  %v877 = vunpack.c.l.b16 %v680
  %v878 = vunpack.c.l.b16 %v681
  %v879 = vunpack.c.l.b16 %v682
  %v880 = vunpack.c.l.b16 %v683
  %v881 = vunpack.c.l.b16 %v684
  %v882 = vunpack.c.l.b16 %v685
  %v883 = vunpack.c.l.b16 %v686
  %v884 = vunpack.c.l.b16 %v687
  %v885 = vunpack.c.l.b16 %v688
  %v886 = vunpack.c.l.b16 %v689
  %v887 = vunpack.c.l.b16 %v690
  %v888 = vunpack.c.l.b16 %v691
  %v889 = vunpack.c.l.b16 %v692
  %v890 = vunpack.c.l.b16 %v693
  %v891 = vunpack.c.l.b16 %v694
  %v892 = vunpack.c.l.b16 %v695
  %v893 = vunpack.c.l.b16 %v696
  %v894 = vunpack.c.l.b16 %v697
  %v895 = vunpack.c.l.b16 %v698
  %v896 = vunpack.c.l.b16 %v699
  %v897 = vunpack.c.l.b16 %v700
  %v898 = vunpack.c.l.b16 %v701
  %v899 = vunpack.c.l.b16 %v702
  %v900 = vunpack.c.l.b16 %v703
  %v901 = vunpack.c.l.b16 %v704
  %v902 = vunpack.c.l.b16 %v705
  %v903 = vunpack.c.l.b16 %v706
  %v904 = vunpack.c.l.b16 %v707
  %v905 = vunpack.c.l.b16 %v708
  %v906 = vunpack.c.l.b16 %v709
  %v907 = vunpack.c.l.b16 %v710
  %v908 = vunpack.c.l.b16 %v711
  %v909 = vunpack.c.l.b16 %v712
  %v910 = vunpack.c.l.b16 %v713
  %v911 = vunpack.c.l.b16 %v714
  %v912 = vunpack.c.l.b16 %v715
  %v913 = vunpack.c.l.b16 %v716
  %v914 = vunpack.c.l.b16 %v717
  %v915 = vunpack.c.l.b16 %v718
  %v916 = vunpack.c.l.b16 %v719
  %v917 = vunpack.c.l.b16 %v720
  %v918 = vunpack.c.l.b16 %v721
  %v919 = vunpack.c.l.b16 %v722
  %v920 = vunpack.c.l.b16 %v723
  %v921 = vunpack.c.l.b16 %v724
  %v922 = vunpack.c.l.b16 %v725
  %v923 = vunpack.c.l.b16 %v726
  %v924 = vunpack.c.l.b16 %v727
  %v925 = vunpack.c.l.b16 %v728
  %v926 = vunpack.c.l.b16 %v729
  %v927 = vunpack.c.l.b16 %v730
  %v928 = vunpack.c.l.b16 %v731
  %v929 = vunpack.c.l.b16 %v732
  %v930 = vunpack.c.l.b16 %v733
  %v931 = vunpack.c.l.b16 %v734
  %v932 = vunpack.c.l.b16 %v735
  %v933 = vunpack.c.l.b16 %v736
  %v934 = vunpack.c.l.b16 %v737
  %v935 = vunpack.c.l.b16 %v738
  %v936 = vunpack.c.l.b16 %v739
  %v937 = vunpack.c.l.b16 %v740
  %v938 = vunpack.c.l.b16 %v741
  %v939 = vunpack.c.l.b16 %v742
  %v940 = vunpack.c.l.b16 %v743
  %v941 = vunpack.c.l.b16 %v744
  %v942 = vunpack.c.l.b16 %v745
  %v943 = vunpack.c.l.b16 %v746
  %v944 = vunpack.c.l.b16 %v747
  %v945 = vunpack.c.l.b16 %v748
  %v946 = vunpack.c.l.b16 %v749
  %v947 = vunpack.c.l.b16 %v750
  %v948 = vunpack.c.l.b16 %v751
  %v949 = vunpack.c.l.b16 %v752
  %v950 = vunpack.c.l.b16 %v753
  %v951 = vunpack.c.l.b16 %v754
  %v952 = vunpack.c.l.b16 %v755
  %v953 = vunpack.c.l.b16 %v756
  %v954 = vunpack.c.l.b16 %v757
  %v955 = vunpack.c.l.b16 %v758
  %v956 = vunpack.c.l.b16 %v759
  %v957 = vunpack.c.l.b16 %v760
  %v958 = vunpack.c.l.b16 %v761
  %v959 = vunpack.c.l.b16 %v762
  %v960 = vunpack.c.l.b16 %v763
  %v961 = vunpack.c.l.b16 %v764
  %v962 = vunpack.c.l.b16 %v765
  %v963 = vpack.c.b16 %v868, %v867
  %v964 = vpack.c.b16 %v870, %v869
  %v965 = vpack.c.b16 %v872, %v871
  %v966 = vpack.c.b16 %v874, %v873
  %v967 = vpack.c.b16 %v876, %v875
  %v968 = vpack.c.b16 %v878, %v877
  %v969 = vpack.c.b16 %v880, %v879
  %v970 = vpack.c.b16 %v882, %v881
  %v971 = vpack.c.b16 %v884, %v883
  %v972 = vpack.c.b16 %v886, %v885
  %v973 = vpack.c.b16 %v888, %v887
  %v974 = vpack.c.b16 %v890, %v889
  %v975 = vpack.c.b16 %v892, %v891
  %v976 = vpack.c.b16 %v894, %v893
  %v977 = vpack.c.b16 %v896, %v895
  %v978 = vpack.c.b16 %v898, %v897
  %v979 = vpack.c.b16 %v900, %v899
  %v980 = vpack.c.b16 %v902, %v901
  %v981 = vpack.c.b16 %v904, %v903
  %v982 = vpack.c.b16 %v906, %v905
  %v983 = vpack.c.b16 %v908, %v907
  %v984 = vpack.c.b16 %v910, %v909
  %v985 = vpack.c.b16 %v912, %v911
  %v986 = vpack.c.b16 %v914, %v913
  %v987 = vpack.c.b16 %v916, %v915
  %v988 = vpack.c.b16 %v918, %v917
  %v989 = vpack.c.b16 %v920, %v919
  %v990 = vpack.c.b16 %v922, %v921
  %v991 = vpack.c.b16 %v924, %v923
  %v992 = vpack.c.b16 %v926, %v925
  %v993 = vpack.c.b16 %v928, %v927
  %v994 = vpack.c.b16 %v930, %v929
  %v995 = vpack.c.b16 %v932, %v931
  %v996 = vpack.c.b16 %v934, %v933
  %v997 = vpack.c.b16 %v936, %v935
  %v998 = vpack.c.b16 %v938, %v937
  %v999 = vpack.c.b16 %v940, %v939
  %v1000 = vpack.c.b16 %v942, %v941
  %v1001 = vpack.c.b16 %v944, %v943
  %v1002 = vpack.c.b16 %v946, %v945
  %v1003 = vpack.c.b16 %v948, %v947
  %v1004 = vpack.c.b16 %v950, %v949
  %v1005 = vpack.c.b16 %v952, %v951
  %v1006 = vpack.c.b16 %v954, %v953
  %v1007 = vpack.c.b16 %v956, %v955
  %v1008 = vpack.c.b16 %v958, %v957
  %v1009 = vpack.c.b16 %v960, %v959
  %v1010 = vpack.c.b16 %v962, %v961
  %1059 = vmatprep.subr.bf16.mxu0 0
  %1060 = vmatpush1.bf16.msra.mxu0 %v963
  %1061 = vmatprep.subr.bf16.mxu0 0
  %1062 = vmatpush1.bf16.msra.mxu0 %v964
  %1063 = vmatprep.subr.bf16.mxu0 0
  %1064 = vmatpush1.bf16.msra.mxu0 %v965
  %1065 = vmatprep.subr.bf16.mxu0 0
  %1066 = vmatpush1.bf16.msra.mxu0 %v966
  %1067 = vmatprep.subr.bf16.mxu0 0
  %1068 = vmatpush1.bf16.msra.mxu0 %v967
  %1069 = vmatprep.subr.bf16.mxu0 0
  %1070 = vmatpush1.bf16.msra.mxu0 %v968
  %1071 = vmatprep.subr.bf16.mxu0 0
  %1072 = vmatpush1.bf16.msra.mxu0 %v969
  %1073 = vmatprep.subr.bf16.mxu0 0
  %1074 = vmatpush1.bf16.msra.mxu0 %v970
  %1075 = vmatprep.subr.bf16.mxu0 0
  %1076 = vmatpush1.bf16.msra.mxu0 %v971
  %1077 = vmatprep.subr.bf16.mxu0 0
  %1078 = vmatpush1.bf16.msra.mxu0 %v972
  %1079 = vmatprep.subr.bf16.mxu0 0
  %1080 = vmatpush1.bf16.msra.mxu0 %v973
  %1081 = vmatprep.subr.bf16.mxu0 0
  %1082 = vmatpush1.bf16.msra.mxu0 %v974
  %1083 = vmatprep.subr.bf16.mxu0 0
  %1084 = vmatpush1.bf16.msra.mxu0 %v975
  %1085 = vmatprep.subr.bf16.mxu0 0
  %1086 = vmatpush1.bf16.msra.mxu0 %v976
  %1087 = vmatprep.subr.bf16.mxu0 0
  %1088 = vmatpush1.bf16.msra.mxu0 %v977
  %1089 = vmatprep.subr.bf16.mxu0 0
  %1090 = vmatpush1.bf16.msra.mxu0 %v978
  %1091 = vmatprep.mubr.bf16.mxu0 %v647
  %1092 = vmatmul.mubr.bf16.gmra.mrb[0].mxu0 %v646
  %v1093 = vpop.f32.mrb[0].mxu0
  %v1094 = vadd.f32 %v770, %v1093
  %v1095 = vpop.f32.mrb[0].mxu0
  %v1096 = vpop.f32.mrb[0].mxu0
  %v1097 = vadd.f32 %v770, %v1096
  %v1098 = vpop.f32.mrb[0].mxu0
  %1099 = vmatprep.mubr.bf16.mxu0 %v649
  %1100 = vmatmul.mubr.bf16.gmra.mrb[0].mxu0 %v648
  %v1101 = vpop.f32.mrb[0].mxu0
  %v1102 = vadd.f32 %v770, %v1101
  %v1103 = vpop.f32.mrb[0].mxu0
  %v1104 = vpop.f32.mrb[0].mxu0
  %v1105 = vadd.f32 %v770, %v1104
  %v1106 = vpop.f32.mrb[0].mxu0
  %1107 = vmatprep.mubr.bf16.mxu0 %v651
  %1108 = vmatmul.mubr.bf16.gmra.mrb[0].mxu0 %v650
  %v1109 = vpop.f32.mrb[0].mxu0
  %v1110 = vadd.f32 %v770, %v1109
  %v1111 = vpop.f32.mrb[0].mxu0
  %v1112 = vpop.f32.mrb[0].mxu0
  %v1113 = vadd.f32 %v770, %v1112
  %v1114 = vpop.f32.mrb[0].mxu0
  %1115 = vmatprep.mubr.bf16.mxu0 %v653
  %1116 = vmatmul.mubr.bf16.gmra.mrb[0].mxu0 %v652
  %v1117 = vpop.f32.mrb[0].mxu0
  %v1118 = vadd.f32 %v770, %v1117
  %v1119 = vpop.f32.mrb[0].mxu0
  %v1120 = vpop.f32.mrb[0].mxu0
  %v1121 = vadd.f32 %v770, %v1120
  %v1122 = vpop.f32.mrb[0].mxu0
  %1123 = vdwg.mxu0
  %1124 = vmatprep.subr.bf16.mxu0 0
  %1125 = vmatpush1.bf16.msra.mxu0 %v979
  %1126 = vmatprep.subr.bf16.mxu0 0
  %1127 = vmatpush1.bf16.msra.mxu0 %v980
  %1128 = vmatprep.subr.bf16.mxu0 0
  %1129 = vmatpush1.bf16.msra.mxu0 %v981
  %1130 = vmatprep.subr.bf16.mxu0 0
  %1131 = vmatpush1.bf16.msra.mxu0 %v982
  %1132 = vmatprep.subr.bf16.mxu0 0
  %1133 = vmatpush1.bf16.msra.mxu0 %v983
  %1134 = vmatprep.subr.bf16.mxu0 0
  %1135 = vmatpush1.bf16.msra.mxu0 %v984
  %1136 = vmatprep.subr.bf16.mxu0 0
  %1137 = vmatpush1.bf16.msra.mxu0 %v985
  %1138 = vmatprep.subr.bf16.mxu0 0
  %1139 = vmatpush1.bf16.msra.mxu0 %v986
  %1140 = vmatprep.subr.bf16.mxu0 0
  %1141 = vmatpush1.bf16.msra.mxu0 %v987
  %1142 = vmatprep.subr.bf16.mxu0 0
  %1143 = vmatpush1.bf16.msra.mxu0 %v988
  %1144 = vmatprep.subr.bf16.mxu0 0
  %1145 = vmatpush1.bf16.msra.mxu0 %v989
  %1146 = vmatprep.subr.bf16.mxu0 0
  %1147 = vmatpush1.bf16.msra.mxu0 %v990
  %1148 = vmatprep.subr.bf16.mxu0 0
  %1149 = vmatpush1.bf16.msra.mxu0 %v991
  %1150 = vmatprep.subr.bf16.mxu0 0
  %1151 = vmatpush1.bf16.msra.mxu0 %v992
  %1152 = vmatprep.subr.bf16.mxu0 0
  %1153 = vmatpush1.bf16.msra.mxu0 %v993
  %1154 = vmatprep.subr.bf16.mxu0 0
  %1155 = vmatpush1.bf16.msra.mxu0 %v994
  %1156 = vmatprep.mubr.bf16.mxu0 %v655
  %1157 = vmatmul.mubr.bf16.gmra.mrb[0].mxu0 %v654
  %v1158 = vpop.f32.mrb[0].mxu0
  %v1159 = vadd.f32 %v1094, %v1158
  %v1160 = vpop.f32.mrb[0].mxu0
  %v1161 = vpop.f32.mrb[0].mxu0
  %v1162 = vadd.f32 %v1097, %v1161
  %v1163 = vpop.f32.mrb[0].mxu0
  %1164 = vmatprep.mubr.bf16.mxu0 %v657
  %1165 = vmatmul.mubr.bf16.gmra.mrb[0].mxu0 %v656
  %v1166 = vpop.f32.mrb[0].mxu0
  %v1167 = vadd.f32 %v1102, %v1166
  %v1168 = vpop.f32.mrb[0].mxu0
  %v1169 = vpop.f32.mrb[0].mxu0
  %v1170 = vadd.f32 %v1105, %v1169
  %v1171 = vpop.f32.mrb[0].mxu0
  %1172 = vmatprep.mubr.bf16.mxu0 %v659
  %1173 = vmatmul.mubr.bf16.gmra.mrb[0].mxu0 %v658
  %v1174 = vpop.f32.mrb[0].mxu0
  %v1175 = vadd.f32 %v1110, %v1174
  %v1176 = vpop.f32.mrb[0].mxu0
  %v1177 = vpop.f32.mrb[0].mxu0
  %v1178 = vadd.f32 %v1113, %v1177
  %v1179 = vpop.f32.mrb[0].mxu0
  %1180 = vmatprep.mubr.bf16.mxu0 %v661
  %1181 = vmatmul.mubr.bf16.gmra.mrb[0].mxu0 %v660
  %v1182 = vpop.f32.mrb[0].mxu0
  %v1183 = vadd.f32 %v1118, %v1182
  %v1184 = vpop.f32.mrb[0].mxu0
  %v1185 = vpop.f32.mrb[0].mxu0
  %v1186 = vadd.f32 %v1121, %v1185
  %v1187 = vpop.f32.mrb[0].mxu0
  %1188 = vdwg.mxu0
  %1189 = vmatprep.subr.bf16.mxu0 0
  %1190 = vmatpush1.bf16.msra.mxu0 %v995
  %1191 = vmatprep.subr.bf16.mxu0 0
  %1192 = vmatpush1.bf16.msra.mxu0 %v996
  %1193 = vmatprep.subr.bf16.mxu0 0
  %1194 = vmatpush1.bf16.msra.mxu0 %v997
  %1195 = vmatprep.subr.bf16.mxu0 0
  %1196 = vmatpush1.bf16.msra.mxu0 %v998
  %1197 = vmatprep.subr.bf16.mxu0 0
  %1198 = vmatpush1.bf16.msra.mxu0 %v999
  %1199 = vmatprep.subr.bf16.mxu0 0
  %1200 = vmatpush1.bf16.msra.mxu0 %v1000
  %1201 = vmatprep.subr.bf16.mxu0 0
  %1202 = vmatpush1.bf16.msra.mxu0 %v1001
  %1203 = vmatprep.subr.bf16.mxu0 0
  %1204 = vmatpush1.bf16.msra.mxu0 %v1002
  %1205 = vmatprep.subr.bf16.mxu0 0
  %1206 = vmatpush1.bf16.msra.mxu0 %v1003
  %1207 = vmatprep.subr.bf16.mxu0 0
  %1208 = vmatpush1.bf16.msra.mxu0 %v1004
  %1209 = vmatprep.subr.bf16.mxu0 0
  %1210 = vmatpush1.bf16.msra.mxu0 %v1005
  %1211 = vmatprep.subr.bf16.mxu0 0
  %1212 = vmatpush1.bf16.msra.mxu0 %v1006
  %1213 = vmatprep.subr.bf16.mxu0 0
  %1214 = vmatpush1.bf16.msra.mxu0 %v1007
  %1215 = vmatprep.subr.bf16.mxu0 0
  %1216 = vmatpush1.bf16.msra.mxu0 %v1008
  %1217 = vmatprep.subr.bf16.mxu0 0
  %1218 = vmatpush1.bf16.msra.mxu0 %v1009
  %1219 = vmatprep.subr.bf16.mxu0 0
  %1220 = vmatpush1.bf16.msra.mxu0 %v1010
  %1221 = vmatprep.mubr.bf16.mxu0 %v663
  %1222 = vmatmul.mubr.bf16.gmra.mrb[0].mxu0 %v662
  %v1223 = vpop.f32.mrb[0].mxu0
  %v1224 = vadd.f32 %v1159, %v1223
  %v1225 = vpop.f32.mrb[0].mxu0
  %v1226 = vpop.f32.mrb[0].mxu0
  %v1227 = vadd.f32 %v1162, %v1226
  %v1228 = vpop.f32.mrb[0].mxu0
  %1229 = vmatprep.mubr.bf16.mxu0 %v665
  %1230 = vmatmul.mubr.bf16.gmra.mrb[0].mxu0 %v664
  %v1231 = vpop.f32.mrb[0].mxu0
  %v1232 = vadd.f32 %v1167, %v1231
  %v1233 = vpop.f32.mrb[0].mxu0
  %v1234 = vpop.f32.mrb[0].mxu0
  %v1235 = vadd.f32 %v1170, %v1234
  %v1236 = vpop.f32.mrb[0].mxu0
  %1237 = vmatprep.mubr.bf16.mxu0 %v667
  %1238 = vmatmul.mubr.bf16.gmra.mrb[0].mxu0 %v666
  %v1239 = vpop.f32.mrb[0].mxu0
  %v1240 = vadd.f32 %v1175, %v1239
  %v1241 = vpop.f32.mrb[0].mxu0
  %v1242 = vpop.f32.mrb[0].mxu0
  %v1243 = vadd.f32 %v1178, %v1242
  %v1244 = vpop.f32.mrb[0].mxu0
  %1245 = vmatprep.mubr.bf16.mxu0 %v669
  %1246 = vmatmul.mubr.bf16.gmra.mrb[0].mxu0 %v668
  %v1247 = vpop.f32.mrb[0].mxu0
  %v1248 = vadd.f32 %v1183, %v1247
  %v1249 = vpop.f32.mrb[0].mxu0
  %v1250 = vpop.f32.mrb[0].mxu0
  %v1251 = vadd.f32 %v1186, %v1250
  %v1252 = vpop.f32.mrb[0].mxu0
  %1253 = vdwg.mxu0
  %v1254 = vadd.f32 %v1224, %v1227
  %v1255 = vadd.f32 %v1254, %v1232
  %v1256 = vadd.f32 %v1255, %v1235
  %v1257 = vadd.f32 %v1256, %v1240
  %v1258 = vadd.f32 %v1257, %v1243
  %v1259 = vadd.f32 %v1258, %v1248
  %v1260 = vadd.f32 %v1259, %v1251
  %v1261 = vrot.slane %v1260, 4
  %v1262 = vadd.f32 %v1260, %v1261
  %v1263 = vrot.slane %v1262, 2
  %v1264 = vadd.f32 %v1262, %v1263
  %v1265 = vrot.slane %v1264, 1
  %v1266 = vadd.f32 %v1264, %v1265
  %v1267 = vmul.f32 %v1224, %v1224
  %v1268 = vmul.f32 %v1227, %v1227
  %v1269 = vmul.f32 %v1232, %v1232
  %v1270 = vmul.f32 %v1235, %v1235
  %v1271 = vmul.f32 %v1240, %v1240
  %v1272 = vmul.f32 %v1243, %v1243
  %v1273 = vmul.f32 %v1248, %v1248
  %v1274 = vmul.f32 %v1251, %v1251
  %v1275 = vadd.f32 %v1267, %v1268
  %v1276 = vadd.f32 %v1275, %v1269
  %v1277 = vadd.f32 %v1276, %v1270
  %v1278 = vadd.f32 %v1277, %v1271
  %v1279 = vadd.f32 %v1278, %v1272
  %v1280 = vadd.f32 %v1279, %v1273
  %v1281 = vadd.f32 %v1280, %v1274
  %v1282 = vrot.slane %v1281, 4
  %v1283 = vadd.f32 %v1281, %v1282
  %v1284 = vrot.slane %v1283, 2
  %v1285 = vadd.f32 %v1283, %v1284
  %v1286 = vrot.slane %v1285, 1
  %v1287 = vadd.f32 %v1285, %v1286
  %vm1288 = vcmask 1040384
  %v1289 = vsel %vm1288, %v1266, %v1287
  %1290 = vrot.lane.b32.xlu0 %v1289, 4
  %v1291 = vpop.permute.xlu0 %1290
  %v1292 = vadd.f32 %v1289, %v1291
  %1293 = vrot.lane.b32.xlu0 %v1292, 8
  %v1294 = vpop.permute.xlu0 %1293
  %v1295 = vadd.f32 %v1292, %v1294
  %1296 = vrot.lane.b32.xlu0 %v1295, 16
  %v1297 = vpop.permute.xlu0 %1296
  %v1298 = vadd.f32 %v1295, %v1297
  %1299 = vrot.lane.b32.xlu0 %v1298, 32
  %v1300 = vpop.permute.xlu0 %1299
  %v1301 = vadd.f32 %v1298, %v1300
  %1302 = vrot.lane.b32.xlu0 %v1301, 64
  %v1303 = vpop.permute.xlu0 %1302
  %v1304 = vadd.f32 %v1301, %v1303
  %v1305 = vmul.f32 %v1304, 0.00048828125
  %v1306 = vmul.f32 %v1305, %v1305
  %v1308 = vrot.slane %v1306, 7
  %v1310 = vsub.f32 %v1305, %v1308
  %v1311 = vlaneseq
  %v1312 = vshrl.u32 %v1311, 7
  %v1313 = vsub.s32 0, %v1312
  %v1314 = vrot.slane %v1305, %v1313
  %v1315 = vsub.f32 %v1224, %v1314
  %v1316 = vsub.f32 %v1227, %v1314
  %v1317 = vsub.f32 %v1232, %v1314
  %v1318 = vsub.f32 %v1235, %v1314
  %v1319 = vsub.f32 %v1240, %v1314
  %v1320 = vsub.f32 %v1243, %v1314
  %v1321 = vsub.f32 %v1248, %v1314
  %v1322 = vsub.f32 %v1251, %v1314
  %v1323 = vadd.f32 %v1310, 1e-05
  %v1324 = vrsqrt.pop %v1323
  %v1325 = vlaneseq
  %v1326 = vshrl.u32 %v1325, 7
  %v1327 = vsub.s32 1, %v1326
  %v1328 = vrot.slane %v1324, %v1327
  %v1329 = vmul.f32 %v1315, %v1328
  %v1330 = vmul.f32 %v1316, %v1328
  %v1331 = vmul.f32 %v1317, %v1328
  %v1332 = vmul.f32 %v1318, %v1328
  %v1333 = vmul.f32 %v1319, %v1328
  %v1334 = vmul.f32 %v1320, %v1328
  %v1335 = vmul.f32 %v1321, %v1328
  %v1336 = vmul.f32 %v1322, %v1328
  %v1337 = vld [vmem:[%s5 + $0x1] sm:$0x1]
  %v1338 = vlaneseq
  %v1339 = vshrl.u32 %v1338, 7
  %v1340 = vsub.s32 0, %v1339
  %v1341 = vrot.slane %v1337, %v1340
  %v1342 = vmul.f32 %v1329, %v1341
  %v1343 = vmul.f32 %v1330, %v1341
  %v1344 = vmul.f32 %v1331, %v1341
  %v1345 = vmul.f32 %v1332, %v1341
  %v1346 = vmul.f32 %v1333, %v1341
  %v1347 = vmul.f32 %v1334, %v1341
  %v1348 = vmul.f32 %v1335, %v1341
  %v1349 = vmul.f32 %v1336, %v1341
  %v1350 = vld [vmem:[%s5 + $0x2] sm:$0x1]
  %v1351 = vlaneseq
  %v1352 = vshrl.u32 %v1351, 7
  %v1353 = vsub.s32 0, %v1352
  %v1354 = vrot.slane %v1350, %v1353
  %v1355 = vadd.f32 %v1342, %v1354
  %v1356 = vadd.f32 %v1343, %v1354
  %v1357 = vadd.f32 %v1344, %v1354
  %v1358 = vadd.f32 %v1345, %v1354
  %v1359 = vadd.f32 %v1346, %v1354
  %v1360 = vadd.f32 %v1347, %v1354
  %v1361 = vadd.f32 %v1348, %v1354
  %v1362 = vadd.f32 %v1349, %v1354
  %v1363 = vmax.f32 %v1355, 0.0
  %v1364 = vmax.f32 %v1356, 0.0
  %v1365 = vmax.f32 %v1357, 0.0
  %v1366 = vmax.f32 %v1358, 0.0
  %v1367 = vmax.f32 %v1359, 0.0
  %v1368 = vmax.f32 %v1360, 0.0
  %v1369 = vmax.f32 %v1361, 0.0
  %v1370 = vmax.f32 %v1362, 0.0
  %v1371 = vrot.slane %v1363, 7
  %v1372 = vrot.slane %v1364, 7
  %v1373 = vrot.slane %v1365, 7
  %v1374 = vrot.slane %v1366, 7
  %v1375 = vrot.slane %v1367, 7
  %v1376 = vrot.slane %v1368, 7
  %v1377 = vrot.slane %v1369, 7
  %v1378 = vrot.slane %v1370, 7
  %v1379 = vsel %vm532, %v1377, %v1378
  %v1380 = vsel %vm532, %v1376, %v1377
  %v1381 = vsel %vm532, %v1375, %v1376
  %v1382 = vsel %vm532, %v1374, %v1375
  %v1383 = vsel %vm532, %v1373, %v1374
  %v1384 = vsel %vm532, %v1372, %v1373
  %v1385 = vsel %vm532, %v1371, %v1372
  %v1386 = vsel %vm532, %v1378, %v1371
  %v1387 = vsel %vm557, 0.0, %v1386
  %v1388 = vsel %vm558, 0.0, %v1385
  %v1389 = vsel %vm559, 0.0, %v1384
  %v1390 = vsel %vm560, 0.0, %v1383
  %v1391 = vsel %vm561, 0.0, %v1382
  %v1392 = vsel %vm562, 0.0, %v1381
  %v1393 = vsel %vm563, 0.0, %v1380
  %v1394 = vsel %vm564, 0.0, %v1379
  %v1395 = vrot.slane %v1363, 1
  %v1396 = vrot.slane %v1364, 1
  %v1397 = vrot.slane %v1365, 1
  %v1398 = vrot.slane %v1366, 1
  %v1399 = vrot.slane %v1367, 1
  %v1400 = vrot.slane %v1368, 1
  %v1401 = vrot.slane %v1369, 1
  %v1402 = vrot.slane %v1370, 1
  %v1403 = vsel %vm597, %v1401, %v1402
  %v1404 = vsel %vm597, %v1400, %v1401
  %v1405 = vsel %vm597, %v1399, %v1400
  %v1406 = vsel %vm597, %v1398, %v1399
  %v1407 = vsel %vm597, %v1397, %v1398
  %v1408 = vsel %vm597, %v1396, %v1397
  %v1409 = vsel %vm597, %v1395, %v1396
  %v1410 = vsel %vm597, %v1402, %v1395
  %v1411 = vsel %vm622, 0.0, %v1409
  %v1412 = vsel %vm623, 0.0, %v1408
  %v1413 = vsel %vm624, 0.0, %v1407
  %v1414 = vsel %vm625, 0.0, %v1406
  %v1415 = vsel %vm626, 0.0, %v1405
  %v1416 = vsel %vm627, 0.0, %v1404
  %v1417 = vsel %vm628, 0.0, %v1403
  %v1418 = vsel %vm629, 0.0, %v1410
  %v1419 = vpack.c.bf16 %v1388, %v1387
  %v1420 = vpack.c.bf16 %v1390, %v1389
  %v1421 = vpack.c.bf16 %v1392, %v1391
  %v1422 = vpack.c.bf16 %v1394, %v1393
  %v1423 = vpack.c.bf16 %v1364, %v1363
  %v1424 = vpack.c.bf16 %v1366, %v1365
  %v1425 = vpack.c.bf16 %v1368, %v1367
  %v1426 = vpack.c.bf16 %v1370, %v1369
  %v1427 = vpack.c.bf16 %v1412, %v1411
  %v1428 = vpack.c.bf16 %v1414, %v1413
  %v1429 = vpack.c.bf16 %v1416, %v1415
  %v1430 = vpack.c.bf16 %v1418, %v1417
  %v1431 = vld [vmem:[%s6] sm:$0xf]
  %v1432 = vld [vmem:[%s6 + $0x4] sm:$0xf]
  %v1433 = vld [vmem:[%s6 + $0x8] sm:$0xf]
  %v1434 = vld [vmem:[%s6 + $0xc] sm:$0xf]
  %v1435 = vld [vmem:[%s6 + $0x10] sm:$0xf]
  %v1436 = vld [vmem:[%s6 + $0x14] sm:$0xf]
  %v1437 = vld [vmem:[%s6 + $0x18] sm:$0xf]
  %v1438 = vld [vmem:[%s6 + $0x1c] sm:$0xf]
  %v1439 = vld [vmem:[%s6 + $0x20] sm:$0xf]
  %v1440 = vld [vmem:[%s6 + $0x24] sm:$0xf]
  %v1441 = vld [vmem:[%s6 + $0x28] sm:$0xf]
  %v1442 = vld [vmem:[%s6 + $0x2c] sm:$0xf]
  %v1443 = vld [vmem:[%s6 + $0x30] sm:$0xf]
  %v1444 = vld [vmem:[%s6 + $0x34] sm:$0xf]
  %v1445 = vld [vmem:[%s6 + $0x38] sm:$0xf]
  %v1446 = vld [vmem:[%s6 + $0x3c] sm:$0xf]
  %v1447 = vld [vmem:[%s6 + $0x40] sm:$0xf]
  %v1448 = vld [vmem:[%s6 + $0x44] sm:$0xf]
  %v1449 = vld [vmem:[%s6 + $0x48] sm:$0xf]
  %v1450 = vld [vmem:[%s6 + $0x4c] sm:$0xf]
  %v1451 = vld [vmem:[%s6 + $0x50] sm:$0xf]
  %v1452 = vld [vmem:[%s6 + $0x54] sm:$0xf]
  %v1453 = vld [vmem:[%s6 + $0x58] sm:$0xf]
  %v1454 = vld [vmem:[%s6 + $0x5c] sm:$0xf]
  %v1455 = vld [vmem:[%s6 + $0x60] sm:$0xf]
  %v1456 = vld [vmem:[%s6 + $0x64] sm:$0xf]
  %v1457 = vld [vmem:[%s6 + $0x68] sm:$0xf]
  %v1458 = vld [vmem:[%s6 + $0x6c] sm:$0xf]
  %v1459 = vld [vmem:[%s6 + $0x70] sm:$0xf]
  %v1460 = vld [vmem:[%s6 + $0x74] sm:$0xf]
  %v1461 = vld [vmem:[%s6 + $0x78] sm:$0xf]
  %v1462 = vld [vmem:[%s6 + $0x7c] sm:$0xf]
  %v1463 = vld [vmem:[%s6 + $0x80] sm:$0xf]
  %v1464 = vld [vmem:[%s6 + $0x84] sm:$0xf]
  %v1465 = vld [vmem:[%s6 + $0x88] sm:$0xf]
  %v1466 = vld [vmem:[%s6 + $0x8c] sm:$0xf]
  %v1467 = vld [vmem:[%s6 + $0x90] sm:$0xf]
  %v1468 = vld [vmem:[%s6 + $0x94] sm:$0xf]
  %v1469 = vld [vmem:[%s6 + $0x98] sm:$0xf]
  %v1470 = vld [vmem:[%s6 + $0x9c] sm:$0xf]
  %v1471 = vld [vmem:[%s6 + $0xa0] sm:$0xf]
  %v1472 = vld [vmem:[%s6 + $0xa4] sm:$0xf]
  %v1473 = vld [vmem:[%s6 + $0xa8] sm:$0xf]
  %v1474 = vld [vmem:[%s6 + $0xac] sm:$0xf]
  %v1475 = vld [vmem:[%s6 + $0xb0] sm:$0xf]
  %v1476 = vld [vmem:[%s6 + $0xb4] sm:$0xf]
  %v1477 = vld [vmem:[%s6 + $0xb8] sm:$0xf]
  %v1478 = vld [vmem:[%s6 + $0xbc] sm:$0xf]
  %v1479 = vld [vmem:[%s7] sm:$0x1]
  %v1480 = vlaneseq
  %v1481 = vshrl.u32 %v1480, 7
  %v1482 = vsub.s32 0, %v1481
  %v1483 = vrot.slane %v1479, %v1482
  %v1532 = vunpack.c.l.b16 %v1431
  %v1533 = vunpack.c.l.b16 %v1432
  %v1534 = vunpack.c.l.b16 %v1433
  %v1535 = vunpack.c.l.b16 %v1434
  %v1536 = vunpack.c.l.b16 %v1435
  %v1537 = vunpack.c.l.b16 %v1436
  %v1538 = vunpack.c.l.b16 %v1437
  %v1539 = vunpack.c.l.b16 %v1438
  %v1540 = vunpack.c.l.b16 %v1439
  %v1541 = vunpack.c.l.b16 %v1440
  %v1542 = vunpack.c.l.b16 %v1441
  %v1543 = vunpack.c.l.b16 %v1442
  %v1544 = vunpack.c.l.b16 %v1443
  %v1545 = vunpack.c.l.b16 %v1444
  %v1546 = vunpack.c.l.b16 %v1445
  %v1547 = vunpack.c.l.b16 %v1446
  %v1548 = vunpack.c.l.b16 %v1447
  %v1549 = vunpack.c.l.b16 %v1448
  %v1550 = vunpack.c.l.b16 %v1449
  %v1551 = vunpack.c.l.b16 %v1450
  %v1552 = vunpack.c.l.b16 %v1451
  %v1553 = vunpack.c.l.b16 %v1452
  %v1554 = vunpack.c.l.b16 %v1453
  %v1555 = vunpack.c.l.b16 %v1454
  %v1556 = vunpack.c.l.b16 %v1455
  %v1557 = vunpack.c.l.b16 %v1456
  %v1558 = vunpack.c.l.b16 %v1457
  %v1559 = vunpack.c.l.b16 %v1458
  %v1560 = vunpack.c.l.b16 %v1459
  %v1561 = vunpack.c.l.b16 %v1460
  %v1562 = vunpack.c.l.b16 %v1461
  %v1563 = vunpack.c.l.b16 %v1462
  %v1564 = vunpack.c.l.b16 %v1463
  %v1565 = vunpack.c.l.b16 %v1464
  %v1566 = vunpack.c.l.b16 %v1465
  %v1567 = vunpack.c.l.b16 %v1466
  %v1568 = vunpack.c.l.b16 %v1467
  %v1569 = vunpack.c.l.b16 %v1468
  %v1570 = vunpack.c.l.b16 %v1469
  %v1571 = vunpack.c.l.b16 %v1470
  %v1572 = vunpack.c.l.b16 %v1471
  %v1573 = vunpack.c.l.b16 %v1472
  %v1574 = vunpack.c.l.b16 %v1473
  %v1575 = vunpack.c.l.b16 %v1474
  %v1576 = vunpack.c.l.b16 %v1475
  %v1577 = vunpack.c.l.b16 %v1476
  %v1578 = vunpack.c.l.b16 %v1477
  %v1579 = vunpack.c.l.b16 %v1478
  %v1580 = vpack.c.b16 %v1533, %v1532
  %v1581 = vpack.c.b16 %v1535, %v1534
  %v1582 = vpack.c.b16 %v1537, %v1536
  %v1583 = vpack.c.b16 %v1539, %v1538
  %v1584 = vpack.c.b16 %v1541, %v1540
  %v1585 = vpack.c.b16 %v1543, %v1542
  %v1586 = vpack.c.b16 %v1545, %v1544
  %v1587 = vpack.c.b16 %v1547, %v1546
  %v1588 = vpack.c.b16 %v1549, %v1548
  %v1589 = vpack.c.b16 %v1551, %v1550
  %v1590 = vpack.c.b16 %v1553, %v1552
  %v1591 = vpack.c.b16 %v1555, %v1554
  %v1592 = vpack.c.b16 %v1557, %v1556
  %v1593 = vpack.c.b16 %v1559, %v1558
  %v1594 = vpack.c.b16 %v1561, %v1560
  %v1595 = vpack.c.b16 %v1563, %v1562
  %v1596 = vpack.c.b16 %v1565, %v1564
  %v1597 = vpack.c.b16 %v1567, %v1566
  %v1598 = vpack.c.b16 %v1569, %v1568
  %v1599 = vpack.c.b16 %v1571, %v1570
  %v1600 = vpack.c.b16 %v1573, %v1572
  %v1601 = vpack.c.b16 %v1575, %v1574
  %v1602 = vpack.c.b16 %v1577, %v1576
  %v1603 = vpack.c.b16 %v1579, %v1578
  %1628 = vmatprep.subr.bf16.mxu0 0
  %1629 = vmatpush1.bf16.msra.mxu0 %v1580
  %1630 = vmatprep.subr.bf16.mxu0 0
  %1631 = vmatpush1.bf16.msra.mxu0 %v1581
  %1632 = vmatprep.subr.bf16.mxu0 0
  %1633 = vmatpush1.bf16.msra.mxu0 %v1582
  %1634 = vmatprep.subr.bf16.mxu0 0
  %1635 = vmatpush1.bf16.msra.mxu0 %v1583
  %1636 = vmatprep.subr.bf16.mxu0 0
  %1637 = vmatpush1.bf16.msra.mxu0 %v1584
  %1638 = vmatprep.subr.bf16.mxu0 0
  %1639 = vmatpush1.bf16.msra.mxu0 %v1585
  %1640 = vmatprep.subr.bf16.mxu0 0
  %1641 = vmatpush1.bf16.msra.mxu0 %v1586
  %1642 = vmatprep.subr.bf16.mxu0 0
  %1643 = vmatpush1.bf16.msra.mxu0 %v1587
  %1644 = vmatprep.subr.bf16.mxu0 0
  %1645 = vmatpush1.bf16.msra.mxu0 %v1588
  %1646 = vmatprep.subr.bf16.mxu0 0
  %1647 = vmatpush1.bf16.msra.mxu0 %v1589
  %1648 = vmatprep.subr.bf16.mxu0 0
  %1649 = vmatpush1.bf16.msra.mxu0 %v1590
  %1650 = vmatprep.subr.bf16.mxu0 0
  %1651 = vmatpush1.bf16.msra.mxu0 %v1591
  %1652 = vmatprep.subr.bf16.mxu0 0
  %1653 = vmatpush1.bf16.msra.mxu0 %v1592
  %1654 = vmatprep.subr.bf16.mxu0 0
  %1655 = vmatpush1.bf16.msra.mxu0 %v1593
  %1656 = vmatprep.subr.bf16.mxu0 0
  %1657 = vmatpush1.bf16.msra.mxu0 %v1594
  %1658 = vmatprep.subr.bf16.mxu0 0
  %1659 = vmatpush1.bf16.msra.mxu0 %v1595
  %1660 = vmatprep.mubr.bf16.mxu0 %v1423
  %1661 = vmatmul.mubr.bf16.gmra.mrb[0].mxu0 %v1419
  %v1662 = vpop.f32.mrb[0].mxu0
  %v1663 = vadd.f32 %v1483, %v1662
  %v1664 = vpop.f32.mrb[0].mxu0
  %v1665 = vpop.f32.mrb[0].mxu0
  %v1666 = vadd.f32 %v1483, %v1665
  %v1667 = vpop.f32.mrb[0].mxu0
  %1668 = vmatprep.mubr.bf16.mxu0 %v1424
  %1669 = vmatmul.mubr.bf16.gmra.mrb[0].mxu0 %v1420
  %v1670 = vpop.f32.mrb[0].mxu0
  %v1671 = vadd.f32 %v1483, %v1670
  %v1672 = vpop.f32.mrb[0].mxu0
  %v1673 = vpop.f32.mrb[0].mxu0
  %v1674 = vadd.f32 %v1483, %v1673
  %v1675 = vpop.f32.mrb[0].mxu0
  %1676 = vmatprep.mubr.bf16.mxu0 %v1425
  %1677 = vmatmul.mubr.bf16.gmra.mrb[0].mxu0 %v1421
  %v1678 = vpop.f32.mrb[0].mxu0
  %v1679 = vadd.f32 %v1483, %v1678
  %v1680 = vpop.f32.mrb[0].mxu0
  %v1681 = vpop.f32.mrb[0].mxu0
  %v1682 = vadd.f32 %v1483, %v1681
  %v1683 = vpop.f32.mrb[0].mxu0
  %1684 = vmatprep.mubr.bf16.mxu0 %v1426
  %1685 = vmatmul.mubr.bf16.gmra.mrb[0].mxu0 %v1422
  %v1686 = vpop.f32.mrb[0].mxu0
  %v1687 = vadd.f32 %v1483, %v1686
  %v1688 = vpop.f32.mrb[0].mxu0
  %v1689 = vpop.f32.mrb[0].mxu0
  %v1690 = vadd.f32 %v1483, %v1689
  %v1691 = vpop.f32.mrb[0].mxu0
  %1692 = vdwg.mxu0
  %1693 = vmatprep.subr.bf16.mxu0 0
  %1694 = vmatpush1.bf16.msra.mxu0 %v1596
  %1695 = vmatprep.subr.bf16.mxu0 0
  %1696 = vmatpush1.bf16.msra.mxu0 %v1597
  %1697 = vmatprep.subr.bf16.mxu0 0
  %1698 = vmatpush1.bf16.msra.mxu0 %v1598
  %1699 = vmatprep.subr.bf16.mxu0 0
  %1700 = vmatpush1.bf16.msra.mxu0 %v1599
  %1701 = vmatprep.subr.bf16.mxu0 0
  %1702 = vmatpush1.bf16.msra.mxu0 %v1600
  %1703 = vmatprep.subr.bf16.mxu0 0
  %1704 = vmatpush1.bf16.msra.mxu0 %v1601
  %1705 = vmatprep.subr.bf16.mxu0 0
  %1706 = vmatpush1.bf16.msra.mxu0 %v1602
  %1707 = vmatprep.subr.bf16.mxu0 0
  %1708 = vmatpush1.bf16.msra.mxu0 %v1603
  %1709 = vmatprep.subr.bf16.mxu0 0
  %1710 = vmatpush1.bf16.msra.mxu0 0
  %1711 = vmatprep.subr.bf16.mxu0 0
  %1712 = vmatpush1.bf16.msra.mxu0 0
  %1713 = vmatprep.subr.bf16.mxu0 0
  %1714 = vmatpush1.bf16.msra.mxu0 0
  %1715 = vmatprep.subr.bf16.mxu0 0
  %1716 = vmatpush1.bf16.msra.mxu0 0
  %1717 = vmatprep.subr.bf16.mxu0 0
  %1718 = vmatpush1.bf16.msra.mxu0 0
  %1719 = vmatprep.subr.bf16.mxu0 0
  %1720 = vmatpush1.bf16.msra.mxu0 0
  %1721 = vmatprep.subr.bf16.mxu0 0
  %1722 = vmatpush1.bf16.msra.mxu0 0
  %1723 = vmatprep.subr.bf16.mxu0 0
  %1724 = vmatpush1.bf16.msra.mxu0 0
  %1725 = vmatprep.mubr.bf16.mxu0 0
  %1726 = vmatmul.mubr.bf16.gmra.mrb[0].mxu0 %v1427
  %v1727 = vpop.f32.mrb[0].mxu0
  %v1728 = vadd.f32 %v1663, %v1727
  %v1729 = vpop.f32.mrb[0].mxu0
  %v1730 = vpop.f32.mrb[0].mxu0
  %v1731 = vadd.f32 %v1666, %v1730
  %v1732 = vpop.f32.mrb[0].mxu0
  %1733 = vmatprep.mubr.bf16.mxu0 0
  %1734 = vmatmul.mubr.bf16.gmra.mrb[0].mxu0 %v1428
  %v1735 = vpop.f32.mrb[0].mxu0
  %v1736 = vadd.f32 %v1671, %v1735
  %v1737 = vpop.f32.mrb[0].mxu0
  %v1738 = vpop.f32.mrb[0].mxu0
  %v1739 = vadd.f32 %v1674, %v1738
  %v1740 = vpop.f32.mrb[0].mxu0
  %1741 = vmatprep.mubr.bf16.mxu0 0
  %1742 = vmatmul.mubr.bf16.gmra.mrb[0].mxu0 %v1429
  %v1743 = vpop.f32.mrb[0].mxu0
  %v1744 = vadd.f32 %v1679, %v1743
  %v1745 = vpop.f32.mrb[0].mxu0
  %v1746 = vpop.f32.mrb[0].mxu0
  %v1747 = vadd.f32 %v1682, %v1746
  %v1748 = vpop.f32.mrb[0].mxu0
  %1749 = vmatprep.mubr.bf16.mxu0 0
  %1750 = vmatmul.mubr.bf16.gmra.mrb[0].mxu0 %v1430
  %v1751 = vpop.f32.mrb[0].mxu0
  %v1752 = vadd.f32 %v1687, %v1751
  %v1753 = vpop.f32.mrb[0].mxu0
  %v1754 = vpop.f32.mrb[0].mxu0
  %v1755 = vadd.f32 %v1690, %v1754
  %v1756 = vpop.f32.mrb[0].mxu0
  %1757 = vdwg.mxu0
  %v1758 = vadd.f32 %v1728, %v1731
  %v1759 = vadd.f32 %v1758, %v1736
  %v1760 = vadd.f32 %v1759, %v1739
  %v1761 = vadd.f32 %v1760, %v1744
  %v1762 = vadd.f32 %v1761, %v1747
  %v1763 = vadd.f32 %v1762, %v1752
  %v1764 = vadd.f32 %v1763, %v1755
  %v1765 = vrot.slane %v1764, 4
  %v1766 = vadd.f32 %v1764, %v1765
  %v1767 = vrot.slane %v1766, 2
  %v1768 = vadd.f32 %v1766, %v1767
  %v1769 = vrot.slane %v1768, 1
  %v1770 = vadd.f32 %v1768, %v1769
  %v1771 = vmul.f32 %v1728, %v1728
  %v1772 = vmul.f32 %v1731, %v1731
  %v1773 = vmul.f32 %v1736, %v1736
  %v1774 = vmul.f32 %v1739, %v1739
  %v1775 = vmul.f32 %v1744, %v1744
  %v1776 = vmul.f32 %v1747, %v1747
  %v1777 = vmul.f32 %v1752, %v1752
  %v1778 = vmul.f32 %v1755, %v1755
  %v1779 = vadd.f32 %v1771, %v1772
  %v1780 = vadd.f32 %v1779, %v1773
  %v1781 = vadd.f32 %v1780, %v1774
  %v1782 = vadd.f32 %v1781, %v1775
  %v1783 = vadd.f32 %v1782, %v1776
  %v1784 = vadd.f32 %v1783, %v1777
  %v1785 = vadd.f32 %v1784, %v1778
  %v1786 = vrot.slane %v1785, 4
  %v1787 = vadd.f32 %v1785, %v1786
  %v1788 = vrot.slane %v1787, 2
  %v1789 = vadd.f32 %v1787, %v1788
  %v1790 = vrot.slane %v1789, 1
  %v1791 = vadd.f32 %v1789, %v1790
  %v1792 = vsel %vm1288, %v1770, %v1791
  %1793 = vrot.lane.b32.xlu0 %v1792, 4
  %v1794 = vpop.permute.xlu0 %1793
  %v1795 = vadd.f32 %v1792, %v1794
  %1796 = vrot.lane.b32.xlu0 %v1795, 8
  %v1797 = vpop.permute.xlu0 %1796
  %v1798 = vadd.f32 %v1795, %v1797
  %1799 = vrot.lane.b32.xlu0 %v1798, 16
  %v1800 = vpop.permute.xlu0 %1799
  %v1801 = vadd.f32 %v1798, %v1800
  %1802 = vrot.lane.b32.xlu0 %v1801, 32
  %v1803 = vpop.permute.xlu0 %1802
  %v1804 = vadd.f32 %v1801, %v1803
  %1805 = vrot.lane.b32.xlu0 %v1804, 64
  %v1806 = vpop.permute.xlu0 %1805
  %v1807 = vadd.f32 %v1804, %v1806
  %v1808 = vmul.f32 %v1807, 0.00048828125
  %v1809 = vmul.f32 %v1808, %v1808
  %v1811 = vrot.slane %v1809, 7
  %v1813 = vsub.f32 %v1808, %v1811
  %v1814 = vlaneseq
  %v1815 = vshrl.u32 %v1814, 7
  %v1816 = vsub.s32 0, %v1815
  %v1817 = vrot.slane %v1808, %v1816
  %v1818 = vsub.f32 %v1728, %v1817
  %v1819 = vsub.f32 %v1731, %v1817
  %v1820 = vsub.f32 %v1736, %v1817
  %v1821 = vsub.f32 %v1739, %v1817
  %v1822 = vsub.f32 %v1744, %v1817
  %v1823 = vsub.f32 %v1747, %v1817
  %v1824 = vsub.f32 %v1752, %v1817
  %v1825 = vsub.f32 %v1755, %v1817
  %v1826 = vadd.f32 %v1813, 1e-05
  %v1827 = vrsqrt.pop %v1826
  %v1828 = vlaneseq
  %v1829 = vshrl.u32 %v1828, 7
  %v1830 = vsub.s32 1, %v1829
  %v1831 = vrot.slane %v1827, %v1830
  %v1832 = vmul.f32 %v1818, %v1831
  %v1833 = vmul.f32 %v1819, %v1831
  %v1834 = vmul.f32 %v1820, %v1831
  %v1835 = vmul.f32 %v1821, %v1831
  %v1836 = vmul.f32 %v1822, %v1831
  %v1837 = vmul.f32 %v1823, %v1831
  %v1838 = vmul.f32 %v1824, %v1831
  %v1839 = vmul.f32 %v1825, %v1831
  %v1840 = vld [vmem:[%s7 + $0x1] sm:$0x1]
  %v1841 = vlaneseq
  %v1842 = vshrl.u32 %v1841, 7
  %v1843 = vsub.s32 0, %v1842
  %v1844 = vrot.slane %v1840, %v1843
  %v1845 = vmul.f32 %v1832, %v1844
  %v1846 = vmul.f32 %v1833, %v1844
  %v1847 = vmul.f32 %v1834, %v1844
  %v1848 = vmul.f32 %v1835, %v1844
  %v1849 = vmul.f32 %v1836, %v1844
  %v1850 = vmul.f32 %v1837, %v1844
  %v1851 = vmul.f32 %v1838, %v1844
  %v1852 = vmul.f32 %v1839, %v1844
  %v1853 = vld [vmem:[%s7 + $0x2] sm:$0x1]
  %v1854 = vlaneseq
  %v1855 = vshrl.u32 %v1854, 7
  %v1856 = vsub.s32 0, %v1855
  %v1857 = vrot.slane %v1853, %v1856
  %v1858 = vadd.f32 %v1845, %v1857
  %v1859 = vadd.f32 %v1846, %v1857
  %v1860 = vadd.f32 %v1847, %v1857
  %v1861 = vadd.f32 %v1848, %v1857
  %v1862 = vadd.f32 %v1849, %v1857
  %v1863 = vadd.f32 %v1850, %v1857
  %v1864 = vadd.f32 %v1851, %v1857
  %v1865 = vadd.f32 %v1852, %v1857
  %v1866 = vmax.f32 %v1858, 0.0
  %v1867 = vmax.f32 %v1859, 0.0
  %v1868 = vmax.f32 %v1860, 0.0
  %v1869 = vmax.f32 %v1861, 0.0
  %v1870 = vmax.f32 %v1862, 0.0
  %v1871 = vmax.f32 %v1863, 0.0
  %v1872 = vmax.f32 %v1864, 0.0
  %v1873 = vmax.f32 %v1865, 0.0
  %1874 = vst [vmem:[%s8] sm:$0xff] %v1866
  %1875 = vst [vmem:[%s8 + $0x8] sm:$0xff] %v1867
  %1876 = vst [vmem:[%s8 + $0x10] sm:$0xff] %v1868
  %1877 = vst [vmem:[%s8 + $0x18] sm:$0xff] %v1869
  %1878 = vst [vmem:[%s8 + $0x20] sm:$0xff] %v1870
  %1879 = vst [vmem:[%s8 + $0x28] sm:$0xff] %v1871
  %1880 = vst [vmem:[%s8 + $0x30] sm:$0xff] %v1872
  %1881 = vst [vmem:[%s8 + $0x38] sm:$0xff] %v1873
  // Predicated region
  $region34: #{_decoder_block_impl.1} parent=0 // pred_check
    _
  $region35: #{_decoder_block_impl.1} parent=0 // pred_check_branch
    %1883 = sbr.rel (0) target = $region37
  $region36: #{_decoder_block_impl.1} parent=0 // pred_region
    _
  $region37: #{_decoder_block_impl.1} parent=0 // pred_fallthru
    _
  // Predicated region
  $region38: #{_decoder_block_impl.1} parent=0 // pred_check
    _
  $region39: #{_decoder_block_impl.1} parent=0 // pred_check_branch
    %1885 = sbr.rel (0) target = $region41
  $region40: #{_decoder_block_impl.1} parent=0 // pred_region
    _
  $region41: #{_decoder_block_impl.1} parent=0 // pred_fallthru
    _

</llo_original>
